<compile_context>
chip_gen: v5e
topology: v5e:2x2
jax: 0.10.0
libtpu: 0.0.40
codegen_flags: <defaults>
</compile_context>

<pallas_src>
import functools

import jax
import jax.numpy as jnp
from jax import lax
from jax.experimental import pallas as pl
from jax.experimental.pallas import tpu as pltpu


def _crl_kernel(logits_ref, target_ref, out_ref, *, k, batch_sz, margin, alpha):
    B, C = logits_ref.shape
    x = logits_ref[...].astype(jnp.float32)            # (B, C) logits
    y = target_ref[...].astype(jnp.float32)            # (B, C) targets in {0, 1}

    # -------- BCEWithLogitsLoss (mean) and sigmoid, sharing a single exp --------
    e = jnp.exp(-jnp.abs(x))                            # exp(-|x|), one EUP pass
    bce_elem = jnp.maximum(x, 0.0) - x * y + jnp.log(1.0 + e)
    bce = jnp.sum(jnp.sum(bce_elem, axis=1, keepdims=True),
                  axis=0, keepdims=True) * (1.0 / float(B * C))           # (1, 1)
    inv1pe = 1.0 / (1.0 + e)
    pred = jnp.where(x >= 0.0, inv1pe, e * inv1pe)      # sigmoid(x); only for distances

    # -------- minority-class mask (get_minority_classes) --------
    counts_row = jnp.sum(y, axis=0, keepdims=True)      # (1, C)
    ones_b = jnp.ones((B, 1), jnp.float32)
    # counts as a column vector (class index on sublanes)
    counts_col = lax.dot_general(y, ones_b, (((0,), (0,)), ((), ())),
                                 preferred_element_type=jnp.float32)      # (C, 1)
    cls_row = lax.broadcasted_iota(jnp.int32, (C, C), 1)   # class c   (lanes)
    cls_col = lax.broadcasted_iota(jnp.int32, (C, C), 0)   # class c'  (sublanes)
    # ascending-count order, ties broken by class index (stable-sort equivalent)
    before = ((counts_col < counts_row)
              | ((counts_col == counts_row) & (cls_col <= cls_row))).astype(jnp.float32)
    cum = jnp.sum(counts_col * before, axis=0, keepdims=True)             # (1, C)
    th = 0.5 * float(batch_sz)
    min_row = jnp.where((cum <= th) & (counts_row > 1.0), 1.0, 0.0)       # (1, C)

    pos = y * min_row                                   # positives in minority cols
    neg = (1.0 - y) * min_row                           # negatives in minority cols
    npos = jnp.sum(pos, axis=0, keepdims=True)          # (1, C)
    nneg = jnp.sum(neg, axis=0, keepdims=True)          # (1, C)
    kf = float(k)
    n_n = jnp.minimum(kf, nneg)                         # negatives per anchor grid
    n_p = jnp.maximum(jnp.minimum(kf, npos - 1.0), 0.0) # positives per anchor grid

    # -------- vectorized pairwise ordering / hard mining --------
    # Ordering is done on raw logits (monotone with sigmoid => identical selection).
    bidx = lax.broadcasted_iota(jnp.int32, (B, C), 0)   # row index, constant over C
    a_idx = bidx[:, None, :]                            # (B, 1, C) anchor / "other" row
    j_idx = bidx[None, :, :]                            # (1, B, C) candidate row
    not_self = (a_idx != j_idx).astype(jnp.float32)     # (B, B, C)

    xa = x[:, None, :]                                  # (B, 1, C)
    xj = x[None, :, :]                                  # (1, B, C)
    # less[a, j, c] = 1 if row a sorts strictly before row j in class c
    less = jnp.where((xa < xj) | ((xa == xj) & (a_idx < j_idx)), 1.0, 0.0)

    # rank among positives / negatives of the class (ascending pred, tie by row idx)
    rank_pos = jnp.sum(pos[:, None, :] * less, axis=0)  # (B, C)
    rank_neg = jnp.sum(neg[:, None, :] * less, axis=0)  # (B, C)

    # k lowest-pred negatives per class (these preds are what the reference uses)
    neg_sel = neg * jnp.where(rank_neg < kf, 1.0, 0.0)  # (B, C)

    # |pred_candidate - pred_anchor| for every (anchor, candidate, class)
    diff = jnp.abs(pred[None, :, :] - pred[:, None, :])               # (B, B, C)
    # k lowest-pred positives per class excluding the anchor:
    # rank among positives minus 1 if the anchor itself precedes the candidate
    pos_sel = (pos[None, :, :] * not_self
               * jnp.where((rank_pos[None, :, :] - less) < kf, 1.0, 0.0))   # (B, B, C)

    s_pos_ac = jnp.sum(pos_sel * diff, axis=1)                        # (B, C) per anchor
    s_neg_ac = jnp.sum(neg_sel[None, :, :] * diff, axis=1)            # (B, C) per anchor

    # each anchor contributes n_n * sum|a-p| and n_p * sum|a-n| (meshgrid of pairs)
    s_pos = jnp.sum(jnp.sum(pos * n_n * s_pos_ac, axis=1, keepdims=True),
                    axis=0, keepdims=True)                            # (1, 1)
    s_neg = jnp.sum(jnp.sum(pos * n_p * s_neg_ac, axis=1, keepdims=True),
                    axis=0, keepdims=True)                            # (1, 1)

    crl = jnp.maximum(s_pos - s_neg + float(margin), 0.0)             # (1, 1)
    total_pos = jnp.sum(npos, axis=1, keepdims=True)                  # (1, 1)
    # If P is empty the reference hits the RuntimeError path and returns bce.
    loss = jnp.where(total_pos > 0.0,
                     float(alpha) * crl + (1.0 - float(alpha)) * bce,
                     bce)
    out_ref[...] = loss


@functools.partial(jax.jit, static_argnames=("margin", "alpha", "batch_sz", "k"))
def incremental_class_rectification_loss(logits, target, X=None, *,
                                         margin, alpha, batch_sz, k):
    """Pallas-TPU forward of IncrementalClassRectificationLoss. `X` is unused
    (the PyTorch forward accepts it but never reads it). Inputs are passed in
    their native dtype; the kernel casts to f32 on the VMEM load."""
    del X
    kernel = functools.partial(_crl_kernel, k=int(k), batch_sz=int(batch_sz),
                               margin=float(margin), alpha=float(alpha))
    out = pl.pallas_call(
        kernel,
        out_shape=jax.ShapeDtypeStruct((1, 1), jnp.float32),
        in_specs=[pl.BlockSpec(memory_space=pltpu.MemorySpace.VMEM),
                  pl.BlockSpec(memory_space=pltpu.MemorySpace.VMEM)],
        out_specs=pl.BlockSpec(memory_space=pltpu.MemorySpace.VMEM),
    )(logits, target)
    return out[0, 0]


if __name__ == "__main__":
    B, C = 16, 32          # small batch, 32 "classes"
    K_HARD = 3             # module's k
    MARGIN = 1.0
    ALPHA = 0.01           # alpha = omega * eta in the notebook; deterministic value

    key = jax.random.PRNGKey(0)
    k1, k2 = jax.random.split(key)
    logits = jax.random.normal(k1, (B, C), dtype=jnp.float32)
    # class-dependent positive rate -> some rare (minority) and some common classes
    rates = jnp.linspace(0.08, 0.6, C)
    target = (jax.random.uniform(k2, (B, C)) < rates[None, :]).astype(jnp.float32)

    loss = incremental_class_rectification_loss(
        logits, target, margin=MARGIN, alpha=ALPHA, batch_sz=B, k=K_HARD)
    loss = jax.block_until_ready(loss)
    assert bool(jnp.isfinite(loss)), "loss is not finite"
    print("KERNEL_OK")
</pallas_src>

<mosaic_0001>
module attributes {stable_mosaic.version = 11 : i64} {
  func.func @_crl_kernel(%arg0: memref<16x32xf32, #tpu.memory_space<vmem>>, %arg1: memref<16x32xf32, #tpu.memory_space<vmem>>, %arg2: memref<1x1xf32, #tpu.memory_space<vmem>>) attributes {dimension_semantics = [], scalar_prefetch = 0 : i64, scratch_operands = 0 : i64, tpu.core_type = #tpu.core_type<tc>} {
    %c0 = arith.constant 0 : index
    %c0_0 = arith.constant 0 : index
    %0 = vector.load %arg0[%c0, %c0_0] : memref<16x32xf32, #tpu.memory_space<vmem>>, vector<16x32xf32>
    %c0_1 = arith.constant 0 : index
    %c0_2 = arith.constant 0 : index
    %1 = vector.load %arg1[%c0_1, %c0_2] : memref<16x32xf32, #tpu.memory_space<vmem>>, vector<16x32xf32>
    %2 = math.absf %0 : vector<16x32xf32>
    %cst = arith.constant 0.000000e+00 : f32
    %3 = vector.broadcast %cst : f32 to vector<16x32xf32>
    %4 = arith.subf %3, %2 : vector<16x32xf32>
    %5 = math.exp %4 : vector<16x32xf32>
    %cst_3 = arith.constant 0.000000e+00 : f32
    %6 = vector.broadcast %cst_3 : f32 to vector<16x32xf32>
    %7 = arith.maximumf %0, %6 : vector<16x32xf32>
    %8 = arith.mulf %0, %1 : vector<16x32xf32>
    %9 = arith.subf %7, %8 : vector<16x32xf32>
    %cst_4 = arith.constant 1.000000e+00 : f32
    %10 = vector.broadcast %cst_4 : f32 to vector<16x32xf32>
    %11 = arith.addf %10, %5 : vector<16x32xf32>
    %12 = math.log %11 : vector<16x32xf32>
    %13 = arith.addf %9, %12 : vector<16x32xf32>
    %cst_5 = arith.constant dense<0.000000e+00> : vector<16xf32>
    %14 = vector.multi_reduction <add>, %13, %cst_5 [1] : vector<16x32xf32> to vector<16xf32>
    %15 = vector.shape_cast %14 : vector<16xf32> to vector<16x1xf32>
    %cst_6 = arith.constant dense<0.000000e+00> : vector<1xf32>
    %16 = vector.multi_reduction <add>, %15, %cst_6 [0] : vector<16x1xf32> to vector<1xf32>
    %17 = vector.shape_cast %16 : vector<1xf32> to vector<1x1xf32>
    %cst_7 = arith.constant 0.001953125 : f32
    %18 = vector.broadcast %cst_7 : f32 to vector<1x1xf32>
    %19 = arith.mulf %17, %18 : vector<1x1xf32>
    %cst_8 = arith.constant 1.000000e+00 : f32
    %20 = vector.broadcast %cst_8 : f32 to vector<16x32xf32>
    %21 = arith.addf %20, %5 : vector<16x32xf32>
    %cst_9 = arith.constant 1.000000e+00 : f32
    %22 = vector.broadcast %cst_9 : f32 to vector<16x32xf32>
    %23 = arith.divf %22, %21 : vector<16x32xf32>
    %cst_10 = arith.constant 0.000000e+00 : f32
    %24 = vector.broadcast %cst_10 : f32 to vector<16x32xf32>
    %25 = arith.cmpf oge, %0, %24 : vector<16x32xf32>
    %26 = arith.mulf %5, %23 : vector<16x32xf32>
    %27 = arith.select %25, %23, %26 : vector<16x32xi1>, vector<16x32xf32>
    %cst_11 = arith.constant dense<0.000000e+00> : vector<32xf32>
    %28 = vector.multi_reduction <add>, %1, %cst_11 [0] : vector<16x32xf32> to vector<32xf32>
    %29 = vector.shape_cast %28 : vector<32xf32> to vector<1x32xf32>
    %cst_12 = arith.constant 1.000000e+00 : f32
    %30 = vector.broadcast %cst_12 : f32 to vector<16x1xf32>
    %cst_13 = arith.constant dense<0.000000e+00> : vector<32x1xf32>
    %31 = tpu.matmul %1, %30, %cst_13 {dimension_numbers = #tpu.dot_dimension_numbers<[0], [0], [1], [1], [0, 1, 1, 1], [], []>} : vector<16x32xf32>, vector<16x1xf32>, vector<32x1xf32> -> vector<32x1xf32>
    %32 = tpu.iota {dimensions = array<i32: 1>} : vector<32x32xi32>
    %33 = tpu.iota {dimensions = array<i32: 0>} : vector<32x32xi32>
    %34 = vector.broadcast %31 : vector<32x1xf32> to vector<32x32xf32>
    %35 = vector.broadcast %29 : vector<1x32xf32> to vector<32x32xf32>
    %36 = arith.cmpf olt, %34, %35 : vector<32x32xf32>
    %37 = vector.broadcast %31 : vector<32x1xf32> to vector<32x32xf32>
    %38 = vector.broadcast %29 : vector<1x32xf32> to vector<32x32xf32>
    %39 = arith.cmpf oeq, %37, %38 : vector<32x32xf32>
    %40 = arith.cmpi sle, %33, %32 : vector<32x32xi32>
    %41 = arith.andi %39, %40 : vector<32x32xi1>
    %42 = arith.ori %36, %41 : vector<32x32xi1>
    %43 = arith.extui %42 : vector<32x32xi1> to vector<32x32xi32>
    %44 = arith.sitofp %43 : vector<32x32xi32> to vector<32x32xf32>
    %45 = vector.broadcast %31 : vector<32x1xf32> to vector<32x32xf32>
    %46 = arith.mulf %45, %44 : vector<32x32xf32>
    %cst_14 = arith.constant dense<0.000000e+00> : vector<32xf32>
    %47 = vector.multi_reduction <add>, %46, %cst_14 [0] : vector<32x32xf32> to vector<32xf32>
    %48 = vector.shape_cast %47 : vector<32xf32> to vector<1x32xf32>
    %cst_15 = arith.constant 8.000000e+00 : f32
    %49 = vector.broadcast %cst_15 : f32 to vector<1x32xf32>
    %50 = arith.cmpf ole, %48, %49 : vector<1x32xf32>
    %cst_16 = arith.constant 1.000000e+00 : f32
    %51 = vector.broadcast %cst_16 : f32 to vector<1x32xf32>
    %52 = arith.cmpf ogt, %29, %51 : vector<1x32xf32>
    %53 = arith.andi %50, %52 : vector<1x32xi1>
    %cst_17 = arith.constant 1.000000e+00 : f32
    %cst_18 = arith.constant 0.000000e+00 : f32
    %54 = vector.broadcast %cst_17 : f32 to vector<1x32xf32>
    %55 = vector.broadcast %cst_18 : f32 to vector<1x32xf32>
    %56 = arith.select %53, %54, %55 : vector<1x32xi1>, vector<1x32xf32>
    %57 = vector.broadcast %56 : vector<1x32xf32> to vector<16x32xf32>
    %58 = arith.mulf %1, %57 : vector<16x32xf32>
    %cst_19 = arith.constant 1.000000e+00 : f32
    %59 = vector.broadcast %cst_19 : f32 to vector<16x32xf32>
    %60 = arith.subf %59, %1 : vector<16x32xf32>
    %61 = vector.broadcast %56 : vector<1x32xf32> to vector<16x32xf32>
    %62 = arith.mulf %60, %61 : vector<16x32xf32>
    %cst_20 = arith.constant dense<0.000000e+00> : vector<32xf32>
    %63 = vector.multi_reduction <add>, %58, %cst_20 [0] : vector<16x32xf32> to vector<32xf32>
    %64 = vector.shape_cast %63 : vector<32xf32> to vector<1x32xf32>
    %cst_21 = arith.constant dense<0.000000e+00> : vector<32xf32>
    %65 = vector.multi_reduction <add>, %62, %cst_21 [0] : vector<16x32xf32> to vector<32xf32>
    %66 = vector.shape_cast %65 : vector<32xf32> to vector<1x32xf32>
    %cst_22 = arith.constant 3.000000e+00 : f32
    %67 = vector.broadcast %cst_22 : f32 to vector<1x32xf32>
    %68 = arith.minimumf %67, %66 : vector<1x32xf32>
    %cst_23 = arith.constant 1.000000e+00 : f32
    %69 = vector.broadcast %cst_23 : f32 to vector<1x32xf32>
    %70 = arith.subf %64, %69 : vector<1x32xf32>
    %cst_24 = arith.constant 3.000000e+00 : f32
    %71 = vector.broadcast %cst_24 : f32 to vector<1x32xf32>
    %72 = arith.minimumf %71, %70 : vector<1x32xf32>
    %cst_25 = arith.constant 0.000000e+00 : f32
    %73 = vector.broadcast %cst_25 : f32 to vector<1x32xf32>
    %74 = arith.maximumf %72, %73 : vector<1x32xf32>
    %75 = tpu.iota {dimensions = array<i32: 0>} : vector<16x32xi32>
    %76 = vector.shape_cast %75 : vector<16x32xi32> to vector<16x1x32xi32>
    %77 = vector.shape_cast %75 : vector<16x32xi32> to vector<1x16x32xi32>
    %78 = vector.broadcast %76 : vector<16x1x32xi32> to vector<16x16x32xi32>
    %79 = vector.broadcast %77 : vector<1x16x32xi32> to vector<16x16x32xi32>
    %80 = arith.cmpi ne, %78, %79 : vector<16x16x32xi32>
    %81 = arith.extui %80 : vector<16x16x32xi1> to vector<16x16x32xi32>
    %82 = arith.sitofp %81 : vector<16x16x32xi32> to vector<16x16x32xf32>
    %83 = vector.shape_cast %0 : vector<16x32xf32> to vector<16x1x32xf32>
    %84 = vector.shape_cast %0 : vector<16x32xf32> to vector<1x16x32xf32>
    %85 = vector.broadcast %83 : vector<16x1x32xf32> to vector<16x16x32xf32>
    %86 = vector.broadcast %84 : vector<1x16x32xf32> to vector<16x16x32xf32>
    %87 = arith.cmpf olt, %85, %86 : vector<16x16x32xf32>
    %88 = vector.broadcast %83 : vector<16x1x32xf32> to vector<16x16x32xf32>
    %89 = vector.broadcast %84 : vector<1x16x32xf32> to vector<16x16x32xf32>
    %90 = arith.cmpf oeq, %88, %89 : vector<16x16x32xf32>
    %91 = vector.broadcast %76 : vector<16x1x32xi32> to vector<16x16x32xi32>
    %92 = vector.broadcast %77 : vector<1x16x32xi32> to vector<16x16x32xi32>
    %93 = arith.cmpi slt, %91, %92 : vector<16x16x32xi32>
    %94 = arith.andi %90, %93 : vector<16x16x32xi1>
    %95 = arith.ori %87, %94 : vector<16x16x32xi1>
    %cst_26 = arith.constant 1.000000e+00 : f32
    %cst_27 = arith.constant 0.000000e+00 : f32
    %96 = vector.broadcast %cst_26 : f32 to vector<16x16x32xf32>
    %97 = vector.broadcast %cst_27 : f32 to vector<16x16x32xf32>
    %98 = arith.select %95, %96, %97 : vector<16x16x32xi1>, vector<16x16x32xf32>
    %99 = vector.shape_cast %58 : vector<16x32xf32> to vector<16x1x32xf32>
    %100 = vector.broadcast %99 : vector<16x1x32xf32> to vector<16x16x32xf32>
    %101 = arith.mulf %100, %98 : vector<16x16x32xf32>
    %cst_28 = arith.constant dense<0.000000e+00> : vector<16x32xf32>
    %102 = vector.multi_reduction <add>, %101, %cst_28 [0] : vector<16x16x32xf32> to vector<16x32xf32>
    %103 = vector.shape_cast %62 : vector<16x32xf32> to vector<16x1x32xf32>
    %104 = vector.broadcast %103 : vector<16x1x32xf32> to vector<16x16x32xf32>
    %105 = arith.mulf %104, %98 : vector<16x16x32xf32>
    %cst_29 = arith.constant dense<0.000000e+00> : vector<16x32xf32>
    %106 = vector.multi_reduction <add>, %105, %cst_29 [0] : vector<16x16x32xf32> to vector<16x32xf32>
    %cst_30 = arith.constant 3.000000e+00 : f32
    %107 = vector.broadcast %cst_30 : f32 to vector<16x32xf32>
    %108 = arith.cmpf olt, %106, %107 : vector<16x32xf32>
    %cst_31 = arith.constant 1.000000e+00 : f32
    %cst_32 = arith.constant 0.000000e+00 : f32
    %109 = vector.broadcast %cst_31 : f32 to vector<16x32xf32>
    %110 = vector.broadcast %cst_32 : f32 to vector<16x32xf32>
    %111 = arith.select %108, %109, %110 : vector<16x32xi1>, vector<16x32xf32>
    %112 = arith.mulf %62, %111 : vector<16x32xf32>
    %113 = vector.shape_cast %27 : vector<16x32xf32> to vector<1x16x32xf32>
    %114 = vector.shape_cast %27 : vector<16x32xf32> to vector<16x1x32xf32>
    %115 = vector.broadcast %113 : vector<1x16x32xf32> to vector<16x16x32xf32>
    %116 = vector.broadcast %114 : vector<16x1x32xf32> to vector<16x16x32xf32>
    %117 = arith.subf %115, %116 : vector<16x16x32xf32>
    %118 = math.absf %117 : vector<16x16x32xf32>
    %119 = vector.shape_cast %58 : vector<16x32xf32> to vector<1x16x32xf32>
    %120 = vector.broadcast %119 : vector<1x16x32xf32> to vector<16x16x32xf32>
    %121 = arith.mulf %120, %82 : vector<16x16x32xf32>
    %122 = vector.shape_cast %102 : vector<16x32xf32> to vector<1x16x32xf32>
    %123 = vector.broadcast %122 : vector<1x16x32xf32> to vector<16x16x32xf32>
    %124 = arith.subf %123, %98 : vector<16x16x32xf32>
    %cst_33 = arith.constant 3.000000e+00 : f32
    %125 = vector.broadcast %cst_33 : f32 to vector<16x16x32xf32>
    %126 = arith.cmpf olt, %124, %125 : vector<16x16x32xf32>
    %cst_34 = arith.constant 1.000000e+00 : f32
    %cst_35 = arith.constant 0.000000e+00 : f32
    %127 = vector.broadcast %cst_34 : f32 to vector<16x16x32xf32>
    %128 = vector.broadcast %cst_35 : f32 to vector<16x16x32xf32>
    %129 = arith.select %126, %127, %128 : vector<16x16x32xi1>, vector<16x16x32xf32>
    %130 = arith.mulf %121, %129 : vector<16x16x32xf32>
    %131 = arith.mulf %130, %118 : vector<16x16x32xf32>
    %cst_36 = arith.constant dense<0.000000e+00> : vector<16x32xf32>
    %132 = vector.multi_reduction <add>, %131, %cst_36 [1] : vector<16x16x32xf32> to vector<16x32xf32>
    %133 = vector.shape_cast %112 : vector<16x32xf32> to vector<1x16x32xf32>
    %134 = vector.broadcast %133 : vector<1x16x32xf32> to vector<16x16x32xf32>
    %135 = arith.mulf %134, %118 : vector<16x16x32xf32>
    %cst_37 = arith.constant dense<0.000000e+00> : vector<16x32xf32>
    %136 = vector.multi_reduction <add>, %135, %cst_37 [1] : vector<16x16x32xf32> to vector<16x32xf32>
    %137 = vector.broadcast %68 : vector<1x32xf32> to vector<16x32xf32>
    %138 = arith.mulf %58, %137 : vector<16x32xf32>
    %139 = arith.mulf %138, %132 : vector<16x32xf32>
    %cst_38 = arith.constant dense<0.000000e+00> : vector<16xf32>
    %140 = vector.multi_reduction <add>, %139, %cst_38 [1] : vector<16x32xf32> to vector<16xf32>
    %141 = vector.shape_cast %140 : vector<16xf32> to vector<16x1xf32>
    %cst_39 = arith.constant dense<0.000000e+00> : vector<1xf32>
    %142 = vector.multi_reduction <add>, %141, %cst_39 [0] : vector<16x1xf32> to vector<1xf32>
    %143 = vector.shape_cast %142 : vector<1xf32> to vector<1x1xf32>
    %144 = vector.broadcast %74 : vector<1x32xf32> to vector<16x32xf32>
    %145 = arith.mulf %58, %144 : vector<16x32xf32>
    %146 = arith.mulf %145, %136 : vector<16x32xf32>
    %cst_40 = arith.constant dense<0.000000e+00> : vector<16xf32>
    %147 = vector.multi_reduction <add>, %146, %cst_40 [1] : vector<16x32xf32> to vector<16xf32>
    %148 = vector.shape_cast %147 : vector<16xf32> to vector<16x1xf32>
    %cst_41 = arith.constant dense<0.000000e+00> : vector<1xf32>
    %149 = vector.multi_reduction <add>, %148, %cst_41 [0] : vector<16x1xf32> to vector<1xf32>
    %150 = vector.shape_cast %149 : vector<1xf32> to vector<1x1xf32>
    %151 = arith.subf %143, %150 : vector<1x1xf32>
    %cst_42 = arith.constant 1.000000e+00 : f32
    %152 = vector.broadcast %cst_42 : f32 to vector<1x1xf32>
    %153 = arith.addf %151, %152 : vector<1x1xf32>
    %cst_43 = arith.constant 0.000000e+00 : f32
    %154 = vector.broadcast %cst_43 : f32 to vector<1x1xf32>
    %155 = arith.maximumf %153, %154 : vector<1x1xf32>
    %cst_44 = arith.constant dense<0.000000e+00> : vector<1xf32>
    %156 = vector.multi_reduction <add>, %64, %cst_44 [1] : vector<1x32xf32> to vector<1xf32>
    %157 = vector.shape_cast %156 : vector<1xf32> to vector<1x1xf32>
    %cst_45 = arith.constant 0.000000e+00 : f32
    %158 = vector.broadcast %cst_45 : f32 to vector<1x1xf32>
    %159 = arith.cmpf ogt, %157, %158 : vector<1x1xf32>
    %cst_46 = arith.constant 0.00999999977 : f32
    %160 = vector.broadcast %cst_46 : f32 to vector<1x1xf32>
    %161 = arith.mulf %160, %155 : vector<1x1xf32>
    %cst_47 = arith.constant 9.900000e-01 : f32
    %162 = vector.broadcast %cst_47 : f32 to vector<1x1xf32>
    %163 = arith.mulf %162, %19 : vector<1x1xf32>
    %164 = arith.addf %161, %163 : vector<1x1xf32>
    %165 = arith.select %159, %164, %19 : vector<1x1xi1>, vector<1x1xf32>
    %c0_48 = arith.constant 0 : index
    %c0_49 = arith.constant 0 : index
    %166 = vector.load %arg2[%c0_48, %c0_49] : memref<1x1xf32, #tpu.memory_space<vmem>>, vector<1x1xf32>
    tpu.vector_store %arg2[%c0_48, %c0_49], %165 {strides = array<i32>} : memref<1x1xf32, #tpu.memory_space<vmem>>, vector<1x1xf32>,
    return
  }
}

</mosaic_0001>

<llo_original>
// kernel: incremental_class_rectification_loss.1
$region0: #{incremental_class_rectification_loss.1}
  #allocation0 [shape = 'u32[]', space=smem, size = 0x4, offset = 0x4, fixed_abs, tag = 'smem constant byte address 0x4 - core index']
  #allocation1 [shape = 'u32[72,128]{1,0:T(1,128)}', space=vmem, size = 0x9000, scoped, tag = 'internal scratch']
  %s0 = inlined_call_operand.hbm [shape: f32[16,32], index: 0, kind: input, shape index: {}]
  %s1 = inlined_call_operand.hbm [shape: f32[16,32], index: 1, kind: input, shape index: {}]
  %s2 = inlined_call_operand.hbm [shape: f32[1,1], index: 2, kind: output, shape index: {}]
  %s3 = sld [smem:[#allocation0]]
  $region26: #{incremental_class_rectification_loss.1} parent=0
    _
  %s5 = ssub.s32 1, %s3
  %s6 = scalar_select 0, %s5, %s3
  $region1: #{incremental_class_rectification_loss.1} parent=0
    #allocation2 [shape = 'u8[8192]{0}', space=vmem, size = 0x2000, scoped, tag = 'input window, operand 0, single buffered']
    #allocation3 [shape = 's32[1]{0}', space=sflag, size = 0x4, scoped, tag = 'scoped memory for incremental_class_rectification_loss.1']
    #allocation4 [shape = 's32[1]{0}', space=sflag, size = 0x4, scoped, tag = 'scoped memory for incremental_class_rectification_loss.1']
    #allocation5 [shape = 'u8[8192]{0}', space=vmem, size = 0x2000, scoped, tag = 'input window, operand 1, single buffered']
    #allocation6 [shape = 's32[1]{0}', space=sflag, size = 0x4, scoped, tag = 'scoped memory for incremental_class_rectification_loss.1']
    #allocation7 [shape = 'u8[512]{0}', space=vmem, size = 0x400, scoped, tag = 'output window, operand 0, single buffered']
    %7 = vsyncpa [#allocation3], 0
    %8 = vsyncpa [#allocation6], 0
    %9 = vsyncpa [#allocation4], 0
    // Predicated region
    $region2: #{incremental_class_rectification_loss.1} parent=1 // pred_check
      _
    $region3: #{incremental_class_rectification_loss.1} parent=1 // pred_check_branch
      %11 = sbr.rel (0) target = $region5
    $region4: #{incremental_class_rectification_loss.1} parent=1 // pred_region
      %13 = vsyncadd [#allocation3], 0
      %s14 = sshll.u32 %s0, 4
      %s15 = int_to_ptr.hbm [resolvable:$true] %s14
      %s16 = sshll.u32 [#allocation2], 4
      %s17 = int_to_ptr.vmem [resolvable:$true] %s16
      %22 = dma.hbm_to_vmem [thread:$0]  %s15, 256, %s17, [#allocation3], 128, 128, 8
    $region5: #{incremental_class_rectification_loss.1} parent=1 // pred_fallthru
      _
    // Predicated region
    $region6: #{incremental_class_rectification_loss.1} parent=1 // pred_check
      _
    $region7: #{incremental_class_rectification_loss.1} parent=1 // pred_check_branch
      %24 = sbr.rel (0) target = $region9
    $region8: #{incremental_class_rectification_loss.1} parent=1 // pred_region
      %26 = vsyncadd [#allocation6], 0
      %s27 = sshll.u32 %s1, 4
      %s28 = int_to_ptr.hbm [resolvable:$true] %s27
      %s29 = sshll.u32 [#allocation5], 4
      %s30 = int_to_ptr.vmem [resolvable:$true] %s29
      %35 = dma.hbm_to_vmem [thread:$0]  %s28, 256, %s30, [#allocation6], 128, 128, 8
    $region9: #{incremental_class_rectification_loss.1} parent=1 // pred_fallthru
      _
    // Predicated region
    $region10: #{incremental_class_rectification_loss.1} parent=1 // pred_check
      _
    $region11: #{incremental_class_rectification_loss.1} parent=1 // pred_check_branch
      %37 = sbr.rel (0) target = $region13
    $region12: #{incremental_class_rectification_loss.1} parent=1 // pred_region
      %39 = dma.done [#allocation3], 256
    $region13: #{incremental_class_rectification_loss.1} parent=1 // pred_fallthru
      _
    // Predicated region
    $region14: #{incremental_class_rectification_loss.1} parent=1 // pred_check
      _
    $region15: #{incremental_class_rectification_loss.1} parent=1 // pred_check_branch
      %41 = sbr.rel (0) target = $region17
    $region16: #{incremental_class_rectification_loss.1} parent=1 // pred_region
      %43 = dma.done [#allocation6], 256
    $region17: #{incremental_class_rectification_loss.1} parent=1 // pred_fallthru
      _
    %v44 = vld [vmem:[#allocation2] sm:$0xff]
    %v45 = vld [vmem:[#allocation2 + $0x8] sm:$0xff]
    %v46 = vld [vmem:[#allocation5] sm:$0xff]
    %v47 = vld [vmem:[#allocation5 + $0x8] sm:$0xff]
    %v48 = vand.u32 2147483647, %v44
    %v49 = vand.u32 2147483647, %v45
    %v50 = vsub.f32 0.0, %v48
    %v51 = vsub.f32 0.0, %v49
    %v52 = vmul.f32 %v50, 1.442695
    %v53 = vpow.pop %v52
    %v54 = vmul.f32 %v51, 1.442695
    %v55 = vpow.pop %v54
    %v56 = vmax.f32 %v44, 0.0
    %v57 = vmax.f32 %v45, 0.0
    %v58 = vmul.f32 %v44, %v46
    %v59 = vmul.f32 %v45, %v47
    %v60 = vsub.f32 %v56, %v58
    %v61 = vsub.f32 %v57, %v59
    %v62 = vadd.f32 %v53, 1.0
    %v63 = vadd.f32 %v55, 1.0
    %v64 = vlog2.pop %v62
    %v65 = vmul.f32 %v64, 0.6931472
    %v66 = vlog2.pop %v63
    %v67 = vmul.f32 %v66, 0.6931472
    %v68 = vadd.f32 %v60, %v65
    %v69 = vadd.f32 %v61, %v67
    %vm70 = vcmask 261120
    %v71 = vsel %vm70, %v68, 0.0
    %72 = vadd.xlane.f32.xlu0 %v71
    %v73 = vpop.xlane.xlu0 %72
    %v74 = vsel %vm70, %v69, 0.0
    %75 = vadd.xlane.f32.xlu0 %v74
    %v76 = vpop.xlane.xlu0 %75
    %v77 = vadd.f32 %v73, %v76
    %v78 = vrot.slane %v77, 4
    %v79 = vadd.f32 %v77, %v78
    %v80 = vrot.slane %v79, 2
    %v81 = vadd.f32 %v79, %v80
    %v82 = vrot.slane %v81, 1
    %v83 = vadd.f32 %v81, %v82
    %v84 = vmul.f32 %v83, 0.001953125
    %v85 = vrcp.pop %v62
    %v86 = vmul.f32 %v62, %v85
    %v87 = vsub.f32 1.0, %v86
    %v88 = vmul.f32 %v85, %v87
    %v89 = vadd.f32 %v85, %v88
    %vm90 = vweird.f32 %v62
    %vm91 = vweird.f32 %v85
    %vm92 = vmor %vm90, %vm91
    %v93 = vsel %vm92, %v85, %v89
    %v94 = vand.u32 2147483647, %v62
    %vm95 = vcmp.eq.f32.partialorder %v94, 8.507059e+37
    %v96 = vand.u32 %v62, 2147483648
    %v97 = vor.u32 1.1754944e-38, %v96
    %v98 = vsel %vm95, %v97, %v93
    %v99 = vmul.f32 1.0, %v98
    %v100 = vrcp.pop %v63
    %v101 = vmul.f32 %v63, %v100
    %v102 = vsub.f32 1.0, %v101
    %v103 = vmul.f32 %v100, %v102
    %v104 = vadd.f32 %v100, %v103
    %vm105 = vweird.f32 %v63
    %vm106 = vweird.f32 %v100
    %vm107 = vmor %vm105, %vm106
    %v108 = vsel %vm107, %v100, %v104
    %v109 = vand.u32 2147483647, %v63
    %vm110 = vcmp.eq.f32.partialorder %v109, 8.507059e+37
    %v111 = vand.u32 %v63, 2147483648
    %v112 = vor.u32 1.1754944e-38, %v111
    %v113 = vsel %vm110, %v112, %v108
    %v114 = vmul.f32 1.0, %v113
    %vm115 = vcmp.ge.f32.partialorder %v44, 0.0
    %vm116 = vcmp.ge.f32.partialorder %v45, 0.0
    %v117 = vmul.f32 %v53, %v99
    %v118 = vmul.f32 %v55, %v114
    %v119 = vsel %vm115, %v99, %v117
    %v120 = vsel %vm116, %v114, %v118
    %v121 = vsel %vm70, %v46, 0.0
    %v122 = vsel %vm70, %v47, 0.0
    %v123 = vadd.f32 %v121, %v122
    %v124 = vrot.slane %v123, 4
    %v125 = vadd.f32 %v123, %v124
    %v126 = vrot.slane %v125, 2
    %v127 = vadd.f32 %v125, %v126
    %v128 = vrot.slane %v127, 1
    %v129 = vadd.f32 %v127, %v128
    %130 = vxpose.xlu0.b32.start [1/16] %v46, 128
    %131 = vxpose.xlu0.b32.cont [2/16] %v47, 128
    %132 = vxpose.xlu0.b32.cont [3/16] 0.0, 128
    %133 = vxpose.xlu0.b32.cont [4/16] 0.0, 128
    %134 = vxpose.xlu0.b32.cont [5/16] 0.0, 128
    %135 = vxpose.xlu0.b32.cont [6/16] 0.0, 128
    %136 = vxpose.xlu0.b32.cont [7/16] 0.0, 128
    %137 = vxpose.xlu0.b32.cont [8/16] 0.0, 128
    %138 = vxpose.xlu0.b32.cont [9/16] 0.0, 128
    %139 = vxpose.xlu0.b32.cont [10/16] 0.0, 128
    %140 = vxpose.xlu0.b32.cont [11/16] 0.0, 128
    %141 = vxpose.xlu0.b32.cont [12/16] 0.0, 128
    %142 = vxpose.xlu0.b32.cont [13/16] 0.0, 128
    %143 = vxpose.xlu0.b32.cont [14/16] 0.0, 128
    %144 = vxpose.xlu0.b32.cont [15/16] 0.0, 128
    %145 = vxpose.xlu0.b32.end [16/16] 0.0, 128
    %v146 = vpop.trf.xlu0
    %v147 = vpop.trf.xlu0
    %v148 = vpop.trf.xlu0
    %v149 = vpop.trf.xlu0
    %v150 = vpop.trf.xlu0
    %v151 = vpop.trf.xlu0
    %v152 = vpop.trf.xlu0
    %v153 = vpop.trf.xlu0
    %v154 = vpop.trf.xlu0
    %v155 = vpop.trf.xlu0
    %v156 = vpop.trf.xlu0
    %v157 = vpop.trf.xlu0
    %v158 = vpop.trf.xlu0
    %v159 = vpop.trf.xlu0
    %v160 = vpop.trf.xlu0
    %v161 = vpop.trf.xlu0
    %vm162 = vcmask 130048
    %v164 = vsel %vm162, %v146, 0
    %v167 = vsel %vm162, %v147, 0
    %v170 = vsel %vm162, %v148, 0
    %v173 = vsel %vm162, %v149, 0
    %175 = vmatpush.msra.mxu0 0.0
    %176 = vmatpush.msra.mxu0 0.0
    %177 = vmatpush.msra.mxu0 0.0
    %178 = vmatpush.msra.mxu0 0.0
    %179 = vmatpush.msra.mxu0 0.0
    %180 = vmatpush.msra.mxu0 0.0
    %181 = vmatpush.msra.mxu0 0.0
    %182 = vmatpush.msra.mxu0 0.0
    %183 = vmatpush.msra.mxu0 0.0
    %184 = vmatpush.msra.mxu0 0.0
    %185 = vmatpush.msra.mxu0 0.0
    %186 = vmatpush.msra.mxu0 0.0
    %187 = vmatpush.msra.mxu0 0.0
    %188 = vmatpush.msra.mxu0 0.0
    %189 = vmatpush.msra.mxu0 1.0
    %190 = vmatpush.msra.mxu0 1.0
    %191 = vmatmul.f32.gmra.mxu0 %v164
    %v192 = vpop.f32.mrf.mxu0
    %v193 = vadd.f32 0.0, %v192
    %194 = vmatmul.f32.gmra.mxu0 %v167
    %v195 = vpop.f32.mrf.mxu0
    %v196 = vadd.f32 0.0, %v195
    %197 = vmatmul.f32.gmra.mxu0 %v170
    %v198 = vpop.f32.mrf.mxu0
    %v199 = vadd.f32 0.0, %v198
    %200 = vmatmul.f32.gmra.mxu0 %v173
    %v201 = vpop.f32.mrf.mxu0
    %v202 = vadd.f32 0.0, %v201
    %203 = vdwg.mxu0
    %v204 = vlaneseq
    %v205 = vand.u32 %v204, 127
    %v206 = vlaneseq
    %v207 = vshrl.u32 %v206, 7
    %v208 = vadd.s32 %v207, 8
    %v209 = vadd.s32 %v207, 16
    %v210 = vadd.s32 %v207, 24
    %212 = vset.pattern.permute.xlu0 0
    %213 = vperm.xlu0 %212, %v193
    %v214 = vpop.permute.xlu0 %213
    %217 = vset.pattern.permute.xlu0 0
    %218 = vperm.xlu0 %217, %v196
    %v219 = vpop.permute.xlu0 %218
    %222 = vset.pattern.permute.xlu0 0
    %223 = vperm.xlu0 %222, %v199
    %v224 = vpop.permute.xlu0 %223
    %227 = vset.pattern.permute.xlu0 0
    %228 = vperm.xlu0 %227, %v202
    %v229 = vpop.permute.xlu0 %228
    %vm231 = vcmp.lt.f32.partialorder %v214, %v129
    %vm232 = vcmp.lt.f32.partialorder %v219, %v129
    %vm233 = vcmp.lt.f32.partialorder %v224, %v129
    %vm234 = vcmp.lt.f32.partialorder %v229, %v129
    %vm235 = vcmp.eq.f32.partialorder %v214, %v129
    %vm236 = vcmp.eq.f32.partialorder %v219, %v129
    %vm237 = vcmp.eq.f32.partialorder %v224, %v129
    %vm238 = vcmp.eq.f32.partialorder %v229, %v129
    %vm239 = vcmp.le.s32.totalorder %v207, %v205
    %vm240 = vcmp.le.s32.totalorder %v208, %v205
    %vm241 = vcmp.le.s32.totalorder %v209, %v205
    %vm242 = vcmp.le.s32.totalorder %v210, %v205
    %vm243 = vmand %vm235, %vm239
    %vm244 = vmand %vm236, %vm240
    %vm245 = vmand %vm237, %vm241
    %vm246 = vmand %vm238, %vm242
    %vm247 = vmor %vm231, %vm243
    %vm248 = vmor %vm232, %vm244
    %vm249 = vmor %vm233, %vm245
    %vm250 = vmor %vm234, %vm246
    %v251 = vsel %vm247, 1, 0
    %v252 = vsel %vm248, 1, 0
    %v253 = vsel %vm249, 1, 0
    %v254 = vsel %vm250, 1, 0
    %v255 = vcvt.s32.f32 %v251
    %v256 = vcvt.s32.f32 %v252
    %v257 = vcvt.s32.f32 %v253
    %v258 = vcvt.s32.f32 %v254
    %v259 = vmul.f32 %v214, %v255
    %v260 = vmul.f32 %v219, %v256
    %v261 = vmul.f32 %v224, %v257
    %v262 = vmul.f32 %v229, %v258
    %v263 = vsel %vm70, %v259, 0.0
    %v264 = vsel %vm70, %v260, 0.0
    %v265 = vadd.f32 %v263, %v264
    %v266 = vsel %vm70, %v261, 0.0
    %v267 = vadd.f32 %v265, %v266
    %v268 = vsel %vm70, %v262, 0.0
    %v269 = vadd.f32 %v267, %v268
    %v270 = vrot.slane %v269, 4
    %v271 = vadd.f32 %v269, %v270
    %v272 = vrot.slane %v271, 2
    %v273 = vadd.f32 %v271, %v272
    %v274 = vrot.slane %v273, 1
    %v275 = vadd.f32 %v273, %v274
    %vm276 = vcmp.le.f32.partialorder %v275, 8.0
    %vm277 = vcmp.gt.f32.partialorder %v129, 1.0
    %vm278 = vmand %vm276, %vm277
    %v279 = vsel %vm278, 1.0, 0.0
    %v280 = vmul.f32 %v46, %v279
    %v281 = vmul.f32 %v47, %v279
    %v282 = vsub.f32 1.0, %v46
    %v283 = vsub.f32 1.0, %v47
    %v284 = vmul.f32 %v282, %v279
    %v285 = vmul.f32 %v283, %v279
    %v286 = vsel %vm70, %v280, 0.0
    %v287 = vsel %vm70, %v281, 0.0
    %v288 = vadd.f32 %v286, %v287
    %v289 = vrot.slane %v288, 4
    %v290 = vadd.f32 %v288, %v289
    %v291 = vrot.slane %v290, 2
    %v292 = vadd.f32 %v290, %v291
    %v293 = vrot.slane %v292, 1
    %v294 = vadd.f32 %v292, %v293
    %v295 = vsel %vm70, %v284, 0.0
    %v296 = vsel %vm70, %v285, 0.0
    %v297 = vadd.f32 %v295, %v296
    %v298 = vrot.slane %v297, 4
    %v299 = vadd.f32 %v297, %v298
    %v300 = vrot.slane %v299, 2
    %v301 = vadd.f32 %v299, %v300
    %v302 = vrot.slane %v301, 1
    %v303 = vadd.f32 %v301, %v302
    %v304 = vmin.f32 %v303, 3.0
    %v305 = vsub.f32 %v294, 1.0
    %v306 = vmin.f32 %v305, 3.0
    %v307 = vmax.f32 %v306, 0.0
    %v308 = vperm.slane %v207, 0
    %v309 = vperm.slane %v207, 1
    %v310 = vperm.slane %v207, 2
    %v311 = vperm.slane %v207, 3
    %v312 = vperm.slane %v207, 4
    %v313 = vperm.slane %v207, 5
    %v314 = vperm.slane %v207, 6
    %v315 = vperm.slane %v207, 7
    %v316 = vperm.slane %v208, 0
    %v317 = vperm.slane %v208, 1
    %v318 = vperm.slane %v208, 2
    %v319 = vperm.slane %v208, 3
    %v320 = vperm.slane %v208, 4
    %v321 = vperm.slane %v208, 5
    %v322 = vperm.slane %v208, 6
    %v323 = vperm.slane %v208, 7
    %vm324 = vcmp.ne.s32.totalorder %v308, %v207
    %vm325 = vcmp.ne.s32.totalorder %v308, %v208
    %vm326 = vcmp.ne.s32.totalorder %v309, %v207
    %vm327 = vcmp.ne.s32.totalorder %v309, %v208
    %vm328 = vcmp.ne.s32.totalorder %v310, %v207
    %vm329 = vcmp.ne.s32.totalorder %v310, %v208
    %vm330 = vcmp.ne.s32.totalorder %v311, %v207
    %vm331 = vcmp.ne.s32.totalorder %v311, %v208
    %vm332 = vcmp.ne.s32.totalorder %v312, %v207
    %vm333 = vcmp.ne.s32.totalorder %v312, %v208
    %vm334 = vcmp.ne.s32.totalorder %v313, %v207
    %vm335 = vcmp.ne.s32.totalorder %v313, %v208
    %vm336 = vcmp.ne.s32.totalorder %v314, %v207
    %vm337 = vcmp.ne.s32.totalorder %v314, %v208
    %vm338 = vcmp.ne.s32.totalorder %v315, %v207
    %vm339 = vcmp.ne.s32.totalorder %v315, %v208
    %vm340 = vcmp.ne.s32.totalorder %v316, %v207
    %vm341 = vcmp.ne.s32.totalorder %v316, %v208
    %vm342 = vcmp.ne.s32.totalorder %v317, %v207
    %vm343 = vcmp.ne.s32.totalorder %v317, %v208
    %vm344 = vcmp.ne.s32.totalorder %v318, %v207
    %vm345 = vcmp.ne.s32.totalorder %v318, %v208
    %vm346 = vcmp.ne.s32.totalorder %v319, %v207
    %vm347 = vcmp.ne.s32.totalorder %v319, %v208
    %vm348 = vcmp.ne.s32.totalorder %v320, %v207
    %vm349 = vcmp.ne.s32.totalorder %v320, %v208
    %vm350 = vcmp.ne.s32.totalorder %v321, %v207
    %vm351 = vcmp.ne.s32.totalorder %v321, %v208
    %vm352 = vcmp.ne.s32.totalorder %v322, %v207
    %vm353 = vcmp.ne.s32.totalorder %v322, %v208
    %vm354 = vcmp.ne.s32.totalorder %v323, %v207
    %vm355 = vcmp.ne.s32.totalorder %v323, %v208
    %v356 = vsel %vm324, 1, 0
    %v357 = vsel %vm325, 1, 0
    %v358 = vsel %vm326, 1, 0
    %v359 = vsel %vm327, 1, 0
    %v360 = vsel %vm328, 1, 0
    %v361 = vsel %vm329, 1, 0
    %v362 = vsel %vm330, 1, 0
    %v363 = vsel %vm331, 1, 0
    %v364 = vsel %vm332, 1, 0
    %v365 = vsel %vm333, 1, 0
    %v366 = vsel %vm334, 1, 0
    %v367 = vsel %vm335, 1, 0
    %v368 = vsel %vm336, 1, 0
    %v369 = vsel %vm337, 1, 0
    %v370 = vsel %vm338, 1, 0
    %v371 = vsel %vm339, 1, 0
    %v372 = vsel %vm340, 1, 0
    %v373 = vsel %vm341, 1, 0
    %v374 = vsel %vm342, 1, 0
    %v375 = vsel %vm343, 1, 0
    %v376 = vsel %vm344, 1, 0
    %v377 = vsel %vm345, 1, 0
    %v378 = vsel %vm346, 1, 0
    %v379 = vsel %vm347, 1, 0
    %v380 = vsel %vm348, 1, 0
    %v381 = vsel %vm349, 1, 0
    %v382 = vsel %vm350, 1, 0
    %v383 = vsel %vm351, 1, 0
    %v384 = vsel %vm352, 1, 0
    %v385 = vsel %vm353, 1, 0
    %v386 = vsel %vm354, 1, 0
    %v387 = vsel %vm355, 1, 0
    %v388 = vcvt.s32.f32 %v356
    %v389 = vcvt.s32.f32 %v357
    %v390 = vcvt.s32.f32 %v358
    %v391 = vcvt.s32.f32 %v359
    %v392 = vcvt.s32.f32 %v360
    %v393 = vcvt.s32.f32 %v361
    %v394 = vcvt.s32.f32 %v362
    %v395 = vcvt.s32.f32 %v363
    %v396 = vcvt.s32.f32 %v364
    %v397 = vcvt.s32.f32 %v365
    %v398 = vcvt.s32.f32 %v366
    %v399 = vcvt.s32.f32 %v367
    %v400 = vcvt.s32.f32 %v368
    %v401 = vcvt.s32.f32 %v369
    %v402 = vcvt.s32.f32 %v370
    %v403 = vcvt.s32.f32 %v371
    %v404 = vcvt.s32.f32 %v372
    %v405 = vcvt.s32.f32 %v373
    %v406 = vcvt.s32.f32 %v374
    %v407 = vcvt.s32.f32 %v375
    %v408 = vcvt.s32.f32 %v376
    %v409 = vcvt.s32.f32 %v377
    %v410 = vcvt.s32.f32 %v378
    %v411 = vcvt.s32.f32 %v379
    %v412 = vcvt.s32.f32 %v380
    %v413 = vcvt.s32.f32 %v381
    %v414 = vcvt.s32.f32 %v382
    %v415 = vcvt.s32.f32 %v383
    %v416 = vcvt.s32.f32 %v384
    %v417 = vcvt.s32.f32 %v385
    %v418 = vcvt.s32.f32 %v386
    %v419 = vcvt.s32.f32 %v387
    %v422 = vrot.slane %v44, 1
    %v423 = vrot.slane %v44, 2
    %v424 = vrot.slane %v44, 3
    %v425 = vrot.slane %v44, 4
    %v426 = vrot.slane %v44, 5
    %v427 = vrot.slane %v44, 6
    %v428 = vrot.slane %v44, 7
    %v429 = vrot.slane %v45, 1
    %v430 = vrot.slane %v45, 2
    %v431 = vrot.slane %v45, 3
    %v432 = vrot.slane %v45, 4
    %v433 = vrot.slane %v45, 5
    %v434 = vrot.slane %v45, 6
    %v435 = vrot.slane %v45, 7
    %v436 = vperm.slane %v44, 0
    %v437 = vperm.slane %v422, 0
    %v438 = vperm.slane %v423, 0
    %v439 = vperm.slane %v424, 0
    %v440 = vperm.slane %v425, 0
    %v441 = vperm.slane %v426, 0
    %v442 = vperm.slane %v427, 0
    %v443 = vperm.slane %v428, 0
    %v444 = vperm.slane %v45, 0
    %v445 = vperm.slane %v429, 0
    %v446 = vperm.slane %v430, 0
    %v447 = vperm.slane %v431, 0
    %v448 = vperm.slane %v432, 0
    %v449 = vperm.slane %v433, 0
    %v450 = vperm.slane %v434, 0
    %v451 = vperm.slane %v435, 0
    %vm468 = vcmp.lt.f32.partialorder %v436, %v44
    %vm469 = vcmp.lt.f32.partialorder %v436, %v45
    %vm470 = vcmp.lt.f32.partialorder %v437, %v44
    %vm471 = vcmp.lt.f32.partialorder %v437, %v45
    %vm472 = vcmp.lt.f32.partialorder %v438, %v44
    %vm473 = vcmp.lt.f32.partialorder %v438, %v45
    %vm474 = vcmp.lt.f32.partialorder %v439, %v44
    %vm475 = vcmp.lt.f32.partialorder %v439, %v45
    %vm476 = vcmp.lt.f32.partialorder %v440, %v44
    %vm477 = vcmp.lt.f32.partialorder %v440, %v45
    %vm478 = vcmp.lt.f32.partialorder %v441, %v44
    %vm479 = vcmp.lt.f32.partialorder %v441, %v45
    %vm480 = vcmp.lt.f32.partialorder %v442, %v44
    %vm481 = vcmp.lt.f32.partialorder %v442, %v45
    %vm482 = vcmp.lt.f32.partialorder %v443, %v44
    %vm483 = vcmp.lt.f32.partialorder %v443, %v45
    %vm484 = vcmp.lt.f32.partialorder %v444, %v44
    %vm485 = vcmp.lt.f32.partialorder %v444, %v45
    %vm486 = vcmp.lt.f32.partialorder %v445, %v44
    %vm487 = vcmp.lt.f32.partialorder %v445, %v45
    %vm488 = vcmp.lt.f32.partialorder %v446, %v44
    %vm489 = vcmp.lt.f32.partialorder %v446, %v45
    %vm490 = vcmp.lt.f32.partialorder %v447, %v44
    %vm491 = vcmp.lt.f32.partialorder %v447, %v45
    %vm492 = vcmp.lt.f32.partialorder %v448, %v44
    %vm493 = vcmp.lt.f32.partialorder %v448, %v45
    %vm494 = vcmp.lt.f32.partialorder %v449, %v44
    %vm495 = vcmp.lt.f32.partialorder %v449, %v45
    %vm496 = vcmp.lt.f32.partialorder %v450, %v44
    %vm497 = vcmp.lt.f32.partialorder %v450, %v45
    %vm498 = vcmp.lt.f32.partialorder %v451, %v44
    %vm499 = vcmp.lt.f32.partialorder %v451, %v45
    %vm500 = vcmp.eq.f32.partialorder %v436, %v44
    %vm501 = vcmp.eq.f32.partialorder %v436, %v45
    %vm502 = vcmp.eq.f32.partialorder %v437, %v44
    %vm503 = vcmp.eq.f32.partialorder %v437, %v45
    %vm504 = vcmp.eq.f32.partialorder %v438, %v44
    %vm505 = vcmp.eq.f32.partialorder %v438, %v45
    %vm506 = vcmp.eq.f32.partialorder %v439, %v44
    %vm507 = vcmp.eq.f32.partialorder %v439, %v45
    %vm508 = vcmp.eq.f32.partialorder %v440, %v44
    %vm509 = vcmp.eq.f32.partialorder %v440, %v45
    %vm510 = vcmp.eq.f32.partialorder %v441, %v44
    %vm511 = vcmp.eq.f32.partialorder %v441, %v45
    %vm512 = vcmp.eq.f32.partialorder %v442, %v44
    %vm513 = vcmp.eq.f32.partialorder %v442, %v45
    %vm514 = vcmp.eq.f32.partialorder %v443, %v44
    %vm515 = vcmp.eq.f32.partialorder %v443, %v45
    %vm516 = vcmp.eq.f32.partialorder %v444, %v44
    %vm517 = vcmp.eq.f32.partialorder %v444, %v45
    %vm518 = vcmp.eq.f32.partialorder %v445, %v44
    %vm519 = vcmp.eq.f32.partialorder %v445, %v45
    %vm520 = vcmp.eq.f32.partialorder %v446, %v44
    %vm521 = vcmp.eq.f32.partialorder %v446, %v45
    %vm522 = vcmp.eq.f32.partialorder %v447, %v44
    %vm523 = vcmp.eq.f32.partialorder %v447, %v45
    %vm524 = vcmp.eq.f32.partialorder %v448, %v44
    %vm525 = vcmp.eq.f32.partialorder %v448, %v45
    %vm526 = vcmp.eq.f32.partialorder %v449, %v44
    %vm527 = vcmp.eq.f32.partialorder %v449, %v45
    %vm528 = vcmp.eq.f32.partialorder %v450, %v44
    %vm529 = vcmp.eq.f32.partialorder %v450, %v45
    %vm530 = vcmp.eq.f32.partialorder %v451, %v44
    %vm531 = vcmp.eq.f32.partialorder %v451, %v45
    %vm532 = vcmp.lt.s32.totalorder %v308, %v207
    %vm533 = vcmp.lt.s32.totalorder %v308, %v208
    %vm534 = vcmp.lt.s32.totalorder %v309, %v207
    %vm535 = vcmp.lt.s32.totalorder %v309, %v208
    %vm536 = vcmp.lt.s32.totalorder %v310, %v207
    %vm537 = vcmp.lt.s32.totalorder %v310, %v208
    %vm538 = vcmp.lt.s32.totalorder %v311, %v207
    %vm539 = vcmp.lt.s32.totalorder %v311, %v208
    %vm540 = vcmp.lt.s32.totalorder %v312, %v207
    %vm541 = vcmp.lt.s32.totalorder %v312, %v208
    %vm542 = vcmp.lt.s32.totalorder %v313, %v207
    %vm543 = vcmp.lt.s32.totalorder %v313, %v208
    %vm544 = vcmp.lt.s32.totalorder %v314, %v207
    %vm545 = vcmp.lt.s32.totalorder %v314, %v208
    %vm546 = vcmp.lt.s32.totalorder %v315, %v207
    %vm547 = vcmp.lt.s32.totalorder %v315, %v208
    %vm548 = vcmp.lt.s32.totalorder %v316, %v207
    %vm549 = vcmp.lt.s32.totalorder %v316, %v208
    %vm550 = vcmp.lt.s32.totalorder %v317, %v207
    %vm551 = vcmp.lt.s32.totalorder %v317, %v208
    %vm552 = vcmp.lt.s32.totalorder %v318, %v207
    %vm553 = vcmp.lt.s32.totalorder %v318, %v208
    %vm554 = vcmp.lt.s32.totalorder %v319, %v207
    %vm555 = vcmp.lt.s32.totalorder %v319, %v208
    %vm556 = vcmp.lt.s32.totalorder %v320, %v207
    %vm557 = vcmp.lt.s32.totalorder %v320, %v208
    %vm558 = vcmp.lt.s32.totalorder %v321, %v207
    %vm559 = vcmp.lt.s32.totalorder %v321, %v208
    %vm560 = vcmp.lt.s32.totalorder %v322, %v207
    %vm561 = vcmp.lt.s32.totalorder %v322, %v208
    %vm562 = vcmp.lt.s32.totalorder %v323, %v207
    %vm563 = vcmp.lt.s32.totalorder %v323, %v208
    %vm564 = vmand %vm500, %vm532
    %vm565 = vmand %vm501, %vm533
    %vm566 = vmand %vm502, %vm534
    %vm567 = vmand %vm503, %vm535
    %vm568 = vmand %vm504, %vm536
    %vm569 = vmand %vm505, %vm537
    %vm570 = vmand %vm506, %vm538
    %vm571 = vmand %vm507, %vm539
    %vm572 = vmand %vm508, %vm540
    %vm573 = vmand %vm509, %vm541
    %vm574 = vmand %vm510, %vm542
    %vm575 = vmand %vm511, %vm543
    %vm576 = vmand %vm512, %vm544
    %vm577 = vmand %vm513, %vm545
    %vm578 = vmand %vm514, %vm546
    %vm579 = vmand %vm515, %vm547
    %vm580 = vmand %vm516, %vm548
    %vm581 = vmand %vm517, %vm549
    %vm582 = vmand %vm518, %vm550
    %vm583 = vmand %vm519, %vm551
    %vm584 = vmand %vm520, %vm552
    %vm585 = vmand %vm521, %vm553
    %vm586 = vmand %vm522, %vm554
    %vm587 = vmand %vm523, %vm555
    %vm588 = vmand %vm524, %vm556
    %vm589 = vmand %vm525, %vm557
    %vm590 = vmand %vm526, %vm558
    %vm591 = vmand %vm527, %vm559
    %vm592 = vmand %vm528, %vm560
    %vm593 = vmand %vm529, %vm561
    %vm594 = vmand %vm530, %vm562
    %vm595 = vmand %vm531, %vm563
    %vm596 = vmor %vm468, %vm564
    %vm597 = vmor %vm469, %vm565
    %vm598 = vmor %vm470, %vm566
    %vm599 = vmor %vm471, %vm567
    %vm600 = vmor %vm472, %vm568
    %vm601 = vmor %vm473, %vm569
    %vm602 = vmor %vm474, %vm570
    %vm603 = vmor %vm475, %vm571
    %vm604 = vmor %vm476, %vm572
    %vm605 = vmor %vm477, %vm573
    %vm606 = vmor %vm478, %vm574
    %vm607 = vmor %vm479, %vm575
    %vm608 = vmor %vm480, %vm576
    %vm609 = vmor %vm481, %vm577
    %vm610 = vmor %vm482, %vm578
    %vm611 = vmor %vm483, %vm579
    %vm612 = vmor %vm484, %vm580
    %vm613 = vmor %vm485, %vm581
    %vm614 = vmor %vm486, %vm582
    %vm615 = vmor %vm487, %vm583
    %vm616 = vmor %vm488, %vm584
    %vm617 = vmor %vm489, %vm585
    %vm618 = vmor %vm490, %vm586
    %vm619 = vmor %vm491, %vm587
    %vm620 = vmor %vm492, %vm588
    %vm621 = vmor %vm493, %vm589
    %vm622 = vmor %vm494, %vm590
    %vm623 = vmor %vm495, %vm591
    %vm624 = vmor %vm496, %vm592
    %vm625 = vmor %vm497, %vm593
    %vm626 = vmor %vm498, %vm594
    %vm627 = vmor %vm499, %vm595
    %v628 = vsel %vm596, 1.0, 0.0
    %v629 = vsel %vm597, 1.0, 0.0
    %v630 = vsel %vm598, 1.0, 0.0
    %v631 = vsel %vm599, 1.0, 0.0
    %v632 = vsel %vm600, 1.0, 0.0
    %v633 = vsel %vm601, 1.0, 0.0
    %v634 = vsel %vm602, 1.0, 0.0
    %v635 = vsel %vm603, 1.0, 0.0
    %v636 = vsel %vm604, 1.0, 0.0
    %v637 = vsel %vm605, 1.0, 0.0
    %v638 = vsel %vm606, 1.0, 0.0
    %v639 = vsel %vm607, 1.0, 0.0
    %v640 = vsel %vm608, 1.0, 0.0
    %v641 = vsel %vm609, 1.0, 0.0
    %v642 = vsel %vm610, 1.0, 0.0
    %v643 = vsel %vm611, 1.0, 0.0
    %v644 = vsel %vm612, 1.0, 0.0
    %v645 = vsel %vm613, 1.0, 0.0
    %v646 = vsel %vm614, 1.0, 0.0
    %v647 = vsel %vm615, 1.0, 0.0
    %v648 = vsel %vm616, 1.0, 0.0
    %v649 = vsel %vm617, 1.0, 0.0
    %v650 = vsel %vm618, 1.0, 0.0
    %v651 = vsel %vm619, 1.0, 0.0
    %v652 = vsel %vm620, 1.0, 0.0
    %v653 = vsel %vm621, 1.0, 0.0
    %v654 = vsel %vm622, 1.0, 0.0
    %v655 = vsel %vm623, 1.0, 0.0
    %v656 = vsel %vm624, 1.0, 0.0
    %v657 = vsel %vm625, 1.0, 0.0
    %v658 = vsel %vm626, 1.0, 0.0
    %v659 = vsel %vm627, 1.0, 0.0
    %v662 = vrot.slane %v280, 1
    %v663 = vrot.slane %v280, 2
    %v664 = vrot.slane %v280, 3
    %v665 = vrot.slane %v280, 4
    %v666 = vrot.slane %v280, 5
    %v667 = vrot.slane %v280, 6
    %v668 = vrot.slane %v280, 7
    %v669 = vrot.slane %v281, 1
    %v670 = vrot.slane %v281, 2
    %v671 = vrot.slane %v281, 3
    %v672 = vrot.slane %v281, 4
    %v673 = vrot.slane %v281, 5
    %v674 = vrot.slane %v281, 6
    %v675 = vrot.slane %v281, 7
    %v676 = vperm.slane %v280, 0
    %v677 = vperm.slane %v662, 0
    %v678 = vperm.slane %v663, 0
    %v679 = vperm.slane %v664, 0
    %v680 = vperm.slane %v665, 0
    %v681 = vperm.slane %v666, 0
    %v682 = vperm.slane %v667, 0
    %v683 = vperm.slane %v668, 0
    %v684 = vperm.slane %v281, 0
    %v685 = vperm.slane %v669, 0
    %v686 = vperm.slane %v670, 0
    %v687 = vperm.slane %v671, 0
    %v688 = vperm.slane %v672, 0
    %v689 = vperm.slane %v673, 0
    %v690 = vperm.slane %v674, 0
    %v691 = vperm.slane %v675, 0
    %v708 = vmul.f32 %v676, %v628
    %v709 = vmul.f32 %v676, %v629
    %v710 = vmul.f32 %v677, %v630
    %v711 = vmul.f32 %v677, %v631
    %v712 = vmul.f32 %v678, %v632
    %v713 = vmul.f32 %v678, %v633
    %v714 = vmul.f32 %v679, %v634
    %v715 = vmul.f32 %v679, %v635
    %v716 = vmul.f32 %v680, %v636
    %v717 = vmul.f32 %v680, %v637
    %v718 = vmul.f32 %v681, %v638
    %v719 = vmul.f32 %v681, %v639
    %v720 = vmul.f32 %v682, %v640
    %v721 = vmul.f32 %v682, %v641
    %v722 = vmul.f32 %v683, %v642
    %v723 = vmul.f32 %v683, %v643
    %v724 = vmul.f32 %v684, %v644
    %v725 = vmul.f32 %v684, %v645
    %v726 = vmul.f32 %v685, %v646
    %v727 = vmul.f32 %v685, %v647
    %v728 = vmul.f32 %v686, %v648
    %v729 = vmul.f32 %v686, %v649
    %v730 = vmul.f32 %v687, %v650
    %v731 = vmul.f32 %v687, %v651
    %v732 = vmul.f32 %v688, %v652
    %v733 = vmul.f32 %v688, %v653
    %v734 = vmul.f32 %v689, %v654
    %v735 = vmul.f32 %v689, %v655
    %v736 = vmul.f32 %v690, %v656
    %v737 = vmul.f32 %v690, %v657
    %v738 = vmul.f32 %v691, %v658
    %v739 = vmul.f32 %v691, %v659
    %v740 = vsel %vm70, %v708, 0.0
    %v741 = vsel %vm70, %v710, 0.0
    %v742 = vadd.f32 %v740, %v741
    %v743 = vsel %vm70, %v712, 0.0
    %v744 = vadd.f32 %v742, %v743
    %v745 = vsel %vm70, %v714, 0.0
    %v746 = vadd.f32 %v744, %v745
    %v747 = vsel %vm70, %v716, 0.0
    %v748 = vadd.f32 %v746, %v747
    %v749 = vsel %vm70, %v718, 0.0
    %v750 = vadd.f32 %v748, %v749
    %v751 = vsel %vm70, %v720, 0.0
    %v752 = vadd.f32 %v750, %v751
    %v753 = vsel %vm70, %v722, 0.0
    %v754 = vadd.f32 %v752, %v753
    %v755 = vsel %vm70, %v724, 0.0
    %v756 = vadd.f32 %v754, %v755
    %v757 = vsel %vm70, %v726, 0.0
    %v758 = vadd.f32 %v756, %v757
    %v759 = vsel %vm70, %v728, 0.0
    %v760 = vadd.f32 %v758, %v759
    %v761 = vsel %vm70, %v730, 0.0
    %v762 = vadd.f32 %v760, %v761
    %v763 = vsel %vm70, %v732, 0.0
    %v764 = vadd.f32 %v762, %v763
    %v765 = vsel %vm70, %v734, 0.0
    %v766 = vadd.f32 %v764, %v765
    %v767 = vsel %vm70, %v736, 0.0
    %v768 = vadd.f32 %v766, %v767
    %v769 = vsel %vm70, %v738, 0.0
    %v770 = vadd.f32 %v768, %v769
    %v771 = vsel %vm70, %v709, 0.0
    %v772 = vsel %vm70, %v711, 0.0
    %v773 = vadd.f32 %v771, %v772
    %v774 = vsel %vm70, %v713, 0.0
    %v775 = vadd.f32 %v773, %v774
    %v776 = vsel %vm70, %v715, 0.0
    %v777 = vadd.f32 %v775, %v776
    %v778 = vsel %vm70, %v717, 0.0
    %v779 = vadd.f32 %v777, %v778
    %v780 = vsel %vm70, %v719, 0.0
    %v781 = vadd.f32 %v779, %v780
    %v782 = vsel %vm70, %v721, 0.0
    %v783 = vadd.f32 %v781, %v782
    %v784 = vsel %vm70, %v723, 0.0
    %v785 = vadd.f32 %v783, %v784
    %v786 = vsel %vm70, %v725, 0.0
    %v787 = vadd.f32 %v785, %v786
    %v788 = vsel %vm70, %v727, 0.0
    %v789 = vadd.f32 %v787, %v788
    %v790 = vsel %vm70, %v729, 0.0
    %v791 = vadd.f32 %v789, %v790
    %v792 = vsel %vm70, %v731, 0.0
    %v793 = vadd.f32 %v791, %v792
    %v794 = vsel %vm70, %v733, 0.0
    %v795 = vadd.f32 %v793, %v794
    %v796 = vsel %vm70, %v735, 0.0
    %v797 = vadd.f32 %v795, %v796
    %v798 = vsel %vm70, %v737, 0.0
    %v799 = vadd.f32 %v797, %v798
    %v800 = vsel %vm70, %v739, 0.0
    %v801 = vadd.f32 %v799, %v800
    %v804 = vrot.slane %v284, 1
    %v805 = vrot.slane %v284, 2
    %v806 = vrot.slane %v284, 3
    %v807 = vrot.slane %v284, 4
    %v808 = vrot.slane %v284, 5
    %v809 = vrot.slane %v284, 6
    %v810 = vrot.slane %v284, 7
    %v811 = vrot.slane %v285, 1
    %v812 = vrot.slane %v285, 2
    %v813 = vrot.slane %v285, 3
    %v814 = vrot.slane %v285, 4
    %v815 = vrot.slane %v285, 5
    %v816 = vrot.slane %v285, 6
    %v817 = vrot.slane %v285, 7
    %v818 = vperm.slane %v284, 0
    %v819 = vperm.slane %v804, 0
    %v820 = vperm.slane %v805, 0
    %v821 = vperm.slane %v806, 0
    %v822 = vperm.slane %v807, 0
    %v823 = vperm.slane %v808, 0
    %v824 = vperm.slane %v809, 0
    %v825 = vperm.slane %v810, 0
    %v826 = vperm.slane %v285, 0
    %v827 = vperm.slane %v811, 0
    %v828 = vperm.slane %v812, 0
    %v829 = vperm.slane %v813, 0
    %v830 = vperm.slane %v814, 0
    %v831 = vperm.slane %v815, 0
    %v832 = vperm.slane %v816, 0
    %v833 = vperm.slane %v817, 0
    %v850 = vmul.f32 %v818, %v628
    %v851 = vmul.f32 %v818, %v629
    %v852 = vmul.f32 %v819, %v630
    %v853 = vmul.f32 %v819, %v631
    %v854 = vmul.f32 %v820, %v632
    %v855 = vmul.f32 %v820, %v633
    %v856 = vmul.f32 %v821, %v634
    %v857 = vmul.f32 %v821, %v635
    %v858 = vmul.f32 %v822, %v636
    %v859 = vmul.f32 %v822, %v637
    %v860 = vmul.f32 %v823, %v638
    %v861 = vmul.f32 %v823, %v639
    %v862 = vmul.f32 %v824, %v640
    %v863 = vmul.f32 %v824, %v641
    %v864 = vmul.f32 %v825, %v642
    %v865 = vmul.f32 %v825, %v643
    %v866 = vmul.f32 %v826, %v644
    %v867 = vmul.f32 %v826, %v645
    %v868 = vmul.f32 %v827, %v646
    %v869 = vmul.f32 %v827, %v647
    %v870 = vmul.f32 %v828, %v648
    %v871 = vmul.f32 %v828, %v649
    %v872 = vmul.f32 %v829, %v650
    %v873 = vmul.f32 %v829, %v651
    %v874 = vmul.f32 %v830, %v652
    %v875 = vmul.f32 %v830, %v653
    %v876 = vmul.f32 %v831, %v654
    %v877 = vmul.f32 %v831, %v655
    %v878 = vmul.f32 %v832, %v656
    %v879 = vmul.f32 %v832, %v657
    %v880 = vmul.f32 %v833, %v658
    %v881 = vmul.f32 %v833, %v659
    %v882 = vsel %vm70, %v850, 0.0
    %v883 = vsel %vm70, %v852, 0.0
    %v884 = vadd.f32 %v882, %v883
    %v885 = vsel %vm70, %v854, 0.0
    %v886 = vadd.f32 %v884, %v885
    %v887 = vsel %vm70, %v856, 0.0
    %v888 = vadd.f32 %v886, %v887
    %v889 = vsel %vm70, %v858, 0.0
    %v890 = vadd.f32 %v888, %v889
    %v891 = vsel %vm70, %v860, 0.0
    %v892 = vadd.f32 %v890, %v891
    %v893 = vsel %vm70, %v862, 0.0
    %v894 = vadd.f32 %v892, %v893
    %v895 = vsel %vm70, %v864, 0.0
    %v896 = vadd.f32 %v894, %v895
    %v897 = vsel %vm70, %v866, 0.0
    %v898 = vadd.f32 %v896, %v897
    %v899 = vsel %vm70, %v868, 0.0
    %v900 = vadd.f32 %v898, %v899
    %v901 = vsel %vm70, %v870, 0.0
    %v902 = vadd.f32 %v900, %v901
    %v903 = vsel %vm70, %v872, 0.0
    %v904 = vadd.f32 %v902, %v903
    %v905 = vsel %vm70, %v874, 0.0
    %v906 = vadd.f32 %v904, %v905
    %v907 = vsel %vm70, %v876, 0.0
    %v908 = vadd.f32 %v906, %v907
    %v909 = vsel %vm70, %v878, 0.0
    %v910 = vadd.f32 %v908, %v909
    %v911 = vsel %vm70, %v880, 0.0
    %v912 = vadd.f32 %v910, %v911
    %v913 = vsel %vm70, %v851, 0.0
    %v914 = vsel %vm70, %v853, 0.0
    %v915 = vadd.f32 %v913, %v914
    %v916 = vsel %vm70, %v855, 0.0
    %v917 = vadd.f32 %v915, %v916
    %v918 = vsel %vm70, %v857, 0.0
    %v919 = vadd.f32 %v917, %v918
    %v920 = vsel %vm70, %v859, 0.0
    %v921 = vadd.f32 %v919, %v920
    %v922 = vsel %vm70, %v861, 0.0
    %v923 = vadd.f32 %v921, %v922
    %v924 = vsel %vm70, %v863, 0.0
    %v925 = vadd.f32 %v923, %v924
    %v926 = vsel %vm70, %v865, 0.0
    %v927 = vadd.f32 %v925, %v926
    %v928 = vsel %vm70, %v867, 0.0
    %v929 = vadd.f32 %v927, %v928
    %v930 = vsel %vm70, %v869, 0.0
    %v931 = vadd.f32 %v929, %v930
    %v932 = vsel %vm70, %v871, 0.0
    %v933 = vadd.f32 %v931, %v932
    %v934 = vsel %vm70, %v873, 0.0
    %v935 = vadd.f32 %v933, %v934
    %v936 = vsel %vm70, %v875, 0.0
    %v937 = vadd.f32 %v935, %v936
    %v938 = vsel %vm70, %v877, 0.0
    %v939 = vadd.f32 %v937, %v938
    %v940 = vsel %vm70, %v879, 0.0
    %v941 = vadd.f32 %v939, %v940
    %v942 = vsel %vm70, %v881, 0.0
    %v943 = vadd.f32 %v941, %v942
    %vm944 = vcmp.lt.f32.partialorder %v912, 3.0
    %vm945 = vcmp.lt.f32.partialorder %v943, 3.0
    %v946 = vsel %vm944, 1.0, 0.0
    %v947 = vsel %vm945, 1.0, 0.0
    %v948 = vmul.f32 %v284, %v946
    %v949 = vmul.f32 %v285, %v947
    %v952 = vrot.slane %v119, 1
    %v953 = vrot.slane %v119, 2
    %v954 = vrot.slane %v119, 3
    %v955 = vrot.slane %v119, 4
    %v956 = vrot.slane %v119, 5
    %v957 = vrot.slane %v119, 6
    %v958 = vrot.slane %v119, 7
    %v959 = vrot.slane %v120, 1
    %v960 = vrot.slane %v120, 2
    %v961 = vrot.slane %v120, 3
    %v962 = vrot.slane %v120, 4
    %v963 = vrot.slane %v120, 5
    %v964 = vrot.slane %v120, 6
    %v965 = vrot.slane %v120, 7
    %v966 = vperm.slane %v119, 0
    %v967 = vperm.slane %v952, 0
    %v968 = vperm.slane %v953, 0
    %v969 = vperm.slane %v954, 0
    %v970 = vperm.slane %v955, 0
    %v971 = vperm.slane %v956, 0
    %v972 = vperm.slane %v957, 0
    %v973 = vperm.slane %v958, 0
    %v974 = vperm.slane %v120, 0
    %v975 = vperm.slane %v959, 0
    %v976 = vperm.slane %v960, 0
    %v977 = vperm.slane %v961, 0
    %v978 = vperm.slane %v962, 0
    %v979 = vperm.slane %v963, 0
    %v980 = vperm.slane %v964, 0
    %v981 = vperm.slane %v965, 0
    %v998 = vsub.f32 %v119, %v966
    %v999 = vsub.f32 %v120, %v966
    %v1000 = vsub.f32 %v119, %v967
    %v1001 = vsub.f32 %v120, %v967
    %v1002 = vsub.f32 %v119, %v968
    %v1003 = vsub.f32 %v120, %v968
    %v1004 = vsub.f32 %v119, %v969
    %v1005 = vsub.f32 %v120, %v969
    %v1006 = vsub.f32 %v119, %v970
    %v1007 = vsub.f32 %v120, %v970
    %v1008 = vsub.f32 %v119, %v971
    %v1009 = vsub.f32 %v120, %v971
    %v1010 = vsub.f32 %v119, %v972
    %v1011 = vsub.f32 %v120, %v972
    %v1012 = vsub.f32 %v119, %v973
    %v1013 = vsub.f32 %v120, %v973
    %v1014 = vsub.f32 %v119, %v974
    %v1015 = vsub.f32 %v120, %v974
    %v1016 = vsub.f32 %v119, %v975
    %v1017 = vsub.f32 %v120, %v975
    %v1018 = vsub.f32 %v119, %v976
    %v1019 = vsub.f32 %v120, %v976
    %v1020 = vsub.f32 %v119, %v977
    %v1021 = vsub.f32 %v120, %v977
    %v1022 = vsub.f32 %v119, %v978
    %v1023 = vsub.f32 %v120, %v978
    %v1024 = vsub.f32 %v119, %v979
    %v1025 = vsub.f32 %v120, %v979
    %v1026 = vsub.f32 %v119, %v980
    %v1027 = vsub.f32 %v120, %v980
    %v1028 = vsub.f32 %v119, %v981
    %v1029 = vsub.f32 %v120, %v981
    %v1030 = vand.u32 2147483647, %v998
    %v1031 = vand.u32 2147483647, %v999
    %v1032 = vand.u32 2147483647, %v1000
    %v1033 = vand.u32 2147483647, %v1001
    %v1034 = vand.u32 2147483647, %v1002
    %v1035 = vand.u32 2147483647, %v1003
    %v1036 = vand.u32 2147483647, %v1004
    %v1037 = vand.u32 2147483647, %v1005
    %v1038 = vand.u32 2147483647, %v1006
    %v1039 = vand.u32 2147483647, %v1007
    %v1040 = vand.u32 2147483647, %v1008
    %v1041 = vand.u32 2147483647, %v1009
    %v1042 = vand.u32 2147483647, %v1010
    %v1043 = vand.u32 2147483647, %v1011
    %v1044 = vand.u32 2147483647, %v1012
    %v1045 = vand.u32 2147483647, %v1013
    %v1046 = vand.u32 2147483647, %v1014
    %v1047 = vand.u32 2147483647, %v1015
    %v1048 = vand.u32 2147483647, %v1016
    %v1049 = vand.u32 2147483647, %v1017
    %v1050 = vand.u32 2147483647, %v1018
    %v1051 = vand.u32 2147483647, %v1019
    %v1052 = vand.u32 2147483647, %v1020
    %v1053 = vand.u32 2147483647, %v1021
    %v1054 = vand.u32 2147483647, %v1022
    %v1055 = vand.u32 2147483647, %v1023
    %v1056 = vand.u32 2147483647, %v1024
    %v1057 = vand.u32 2147483647, %v1025
    %v1058 = vand.u32 2147483647, %v1026
    %v1059 = vand.u32 2147483647, %v1027
    %v1060 = vand.u32 2147483647, %v1028
    %v1061 = vand.u32 2147483647, %v1029
    %v1062 = vmul.f32 %v280, %v388
    %v1063 = vmul.f32 %v281, %v389
    %v1064 = vmul.f32 %v280, %v390
    %v1065 = vmul.f32 %v281, %v391
    %v1066 = vmul.f32 %v280, %v392
    %v1067 = vmul.f32 %v281, %v393
    %v1068 = vmul.f32 %v280, %v394
    %v1069 = vmul.f32 %v281, %v395
    %v1070 = vmul.f32 %v280, %v396
    %v1071 = vmul.f32 %v281, %v397
    %v1072 = vmul.f32 %v280, %v398
    %v1073 = vmul.f32 %v281, %v399
    %v1074 = vmul.f32 %v280, %v400
    %v1075 = vmul.f32 %v281, %v401
    %v1076 = vmul.f32 %v280, %v402
    %v1077 = vmul.f32 %v281, %v403
    %v1078 = vmul.f32 %v280, %v404
    %v1079 = vmul.f32 %v281, %v405
    %v1080 = vmul.f32 %v280, %v406
    %v1081 = vmul.f32 %v281, %v407
    %v1082 = vmul.f32 %v280, %v408
    %v1083 = vmul.f32 %v281, %v409
    %v1084 = vmul.f32 %v280, %v410
    %v1085 = vmul.f32 %v281, %v411
    %v1086 = vmul.f32 %v280, %v412
    %v1087 = vmul.f32 %v281, %v413
    %v1088 = vmul.f32 %v280, %v414
    %v1089 = vmul.f32 %v281, %v415
    %v1090 = vmul.f32 %v280, %v416
    %v1091 = vmul.f32 %v281, %v417
    %v1092 = vmul.f32 %v280, %v418
    %v1093 = vmul.f32 %v281, %v419
    %v1094 = vsub.f32 %v770, %v628
    %v1095 = vsub.f32 %v801, %v629
    %v1096 = vsub.f32 %v770, %v630
    %v1097 = vsub.f32 %v801, %v631
    %v1098 = vsub.f32 %v770, %v632
    %v1099 = vsub.f32 %v801, %v633
    %v1100 = vsub.f32 %v770, %v634
    %v1101 = vsub.f32 %v801, %v635
    %v1102 = vsub.f32 %v770, %v636
    %v1103 = vsub.f32 %v801, %v637
    %v1104 = vsub.f32 %v770, %v638
    %v1105 = vsub.f32 %v801, %v639
    %v1106 = vsub.f32 %v770, %v640
    %v1107 = vsub.f32 %v801, %v641
    %v1108 = vsub.f32 %v770, %v642
    %v1109 = vsub.f32 %v801, %v643
    %v1110 = vsub.f32 %v770, %v644
    %v1111 = vsub.f32 %v801, %v645
    %v1112 = vsub.f32 %v770, %v646
    %v1113 = vsub.f32 %v801, %v647
    %v1114 = vsub.f32 %v770, %v648
    %v1115 = vsub.f32 %v801, %v649
    %v1116 = vsub.f32 %v770, %v650
    %v1117 = vsub.f32 %v801, %v651
    %v1118 = vsub.f32 %v770, %v652
    %v1119 = vsub.f32 %v801, %v653
    %v1120 = vsub.f32 %v770, %v654
    %v1121 = vsub.f32 %v801, %v655
    %v1122 = vsub.f32 %v770, %v656
    %v1123 = vsub.f32 %v801, %v657
    %v1124 = vsub.f32 %v770, %v658
    %v1125 = vsub.f32 %v801, %v659
    %vm1126 = vcmp.lt.f32.partialorder %v1094, 3.0
    %vm1127 = vcmp.lt.f32.partialorder %v1095, 3.0
    %vm1128 = vcmp.lt.f32.partialorder %v1096, 3.0
    %vm1129 = vcmp.lt.f32.partialorder %v1097, 3.0
    %vm1130 = vcmp.lt.f32.partialorder %v1098, 3.0
    %vm1131 = vcmp.lt.f32.partialorder %v1099, 3.0
    %vm1132 = vcmp.lt.f32.partialorder %v1100, 3.0
    %vm1133 = vcmp.lt.f32.partialorder %v1101, 3.0
    %vm1134 = vcmp.lt.f32.partialorder %v1102, 3.0
    %vm1135 = vcmp.lt.f32.partialorder %v1103, 3.0
    %vm1136 = vcmp.lt.f32.partialorder %v1104, 3.0
    %vm1137 = vcmp.lt.f32.partialorder %v1105, 3.0
    %vm1138 = vcmp.lt.f32.partialorder %v1106, 3.0
    %vm1139 = vcmp.lt.f32.partialorder %v1107, 3.0
    %vm1140 = vcmp.lt.f32.partialorder %v1108, 3.0
    %vm1141 = vcmp.lt.f32.partialorder %v1109, 3.0
    %vm1142 = vcmp.lt.f32.partialorder %v1110, 3.0
    %vm1143 = vcmp.lt.f32.partialorder %v1111, 3.0
    %vm1144 = vcmp.lt.f32.partialorder %v1112, 3.0
    %vm1145 = vcmp.lt.f32.partialorder %v1113, 3.0
    %vm1146 = vcmp.lt.f32.partialorder %v1114, 3.0
    %vm1147 = vcmp.lt.f32.partialorder %v1115, 3.0
    %vm1148 = vcmp.lt.f32.partialorder %v1116, 3.0
    %vm1149 = vcmp.lt.f32.partialorder %v1117, 3.0
    %vm1150 = vcmp.lt.f32.partialorder %v1118, 3.0
    %vm1151 = vcmp.lt.f32.partialorder %v1119, 3.0
    %vm1152 = vcmp.lt.f32.partialorder %v1120, 3.0
    %vm1153 = vcmp.lt.f32.partialorder %v1121, 3.0
    %vm1154 = vcmp.lt.f32.partialorder %v1122, 3.0
    %vm1155 = vcmp.lt.f32.partialorder %v1123, 3.0
    %vm1156 = vcmp.lt.f32.partialorder %v1124, 3.0
    %vm1157 = vcmp.lt.f32.partialorder %v1125, 3.0
    %v1158 = vsel %vm1126, 1.0, 0.0
    %v1159 = vsel %vm1127, 1.0, 0.0
    %v1160 = vsel %vm1128, 1.0, 0.0
    %v1161 = vsel %vm1129, 1.0, 0.0
    %v1162 = vsel %vm1130, 1.0, 0.0
    %v1163 = vsel %vm1131, 1.0, 0.0
    %v1164 = vsel %vm1132, 1.0, 0.0
    %v1165 = vsel %vm1133, 1.0, 0.0
    %v1166 = vsel %vm1134, 1.0, 0.0
    %v1167 = vsel %vm1135, 1.0, 0.0
    %v1168 = vsel %vm1136, 1.0, 0.0
    %v1169 = vsel %vm1137, 1.0, 0.0
    %v1170 = vsel %vm1138, 1.0, 0.0
    %v1171 = vsel %vm1139, 1.0, 0.0
    %v1172 = vsel %vm1140, 1.0, 0.0
    %v1173 = vsel %vm1141, 1.0, 0.0
    %v1174 = vsel %vm1142, 1.0, 0.0
    %v1175 = vsel %vm1143, 1.0, 0.0
    %v1176 = vsel %vm1144, 1.0, 0.0
    %v1177 = vsel %vm1145, 1.0, 0.0
    %v1178 = vsel %vm1146, 1.0, 0.0
    %v1179 = vsel %vm1147, 1.0, 0.0
    %v1180 = vsel %vm1148, 1.0, 0.0
    %v1181 = vsel %vm1149, 1.0, 0.0
    %v1182 = vsel %vm1150, 1.0, 0.0
    %v1183 = vsel %vm1151, 1.0, 0.0
    %v1184 = vsel %vm1152, 1.0, 0.0
    %v1185 = vsel %vm1153, 1.0, 0.0
    %v1186 = vsel %vm1154, 1.0, 0.0
    %v1187 = vsel %vm1155, 1.0, 0.0
    %v1188 = vsel %vm1156, 1.0, 0.0
    %v1189 = vsel %vm1157, 1.0, 0.0
    %v1190 = vmul.f32 %v1062, %v1158
    %v1191 = vmul.f32 %v1063, %v1159
    %v1192 = vmul.f32 %v1064, %v1160
    %v1193 = vmul.f32 %v1065, %v1161
    %v1194 = vmul.f32 %v1066, %v1162
    %v1195 = vmul.f32 %v1067, %v1163
    %v1196 = vmul.f32 %v1068, %v1164
    %v1197 = vmul.f32 %v1069, %v1165
    %v1198 = vmul.f32 %v1070, %v1166
    %v1199 = vmul.f32 %v1071, %v1167
    %v1200 = vmul.f32 %v1072, %v1168
    %v1201 = vmul.f32 %v1073, %v1169
    %v1202 = vmul.f32 %v1074, %v1170
    %v1203 = vmul.f32 %v1075, %v1171
    %v1204 = vmul.f32 %v1076, %v1172
    %v1205 = vmul.f32 %v1077, %v1173
    %v1206 = vmul.f32 %v1078, %v1174
    %v1207 = vmul.f32 %v1079, %v1175
    %v1208 = vmul.f32 %v1080, %v1176
    %v1209 = vmul.f32 %v1081, %v1177
    %v1210 = vmul.f32 %v1082, %v1178
    %v1211 = vmul.f32 %v1083, %v1179
    %v1212 = vmul.f32 %v1084, %v1180
    %v1213 = vmul.f32 %v1085, %v1181
    %v1214 = vmul.f32 %v1086, %v1182
    %v1215 = vmul.f32 %v1087, %v1183
    %v1216 = vmul.f32 %v1088, %v1184
    %v1217 = vmul.f32 %v1089, %v1185
    %v1218 = vmul.f32 %v1090, %v1186
    %v1219 = vmul.f32 %v1091, %v1187
    %v1220 = vmul.f32 %v1092, %v1188
    %v1221 = vmul.f32 %v1093, %v1189
    %v1222 = vmul.f32 %v1190, %v1030
    %v1223 = vmul.f32 %v1191, %v1031
    %v1224 = vmul.f32 %v1192, %v1032
    %v1225 = vmul.f32 %v1193, %v1033
    %v1226 = vmul.f32 %v1194, %v1034
    %v1227 = vmul.f32 %v1195, %v1035
    %v1228 = vmul.f32 %v1196, %v1036
    %v1229 = vmul.f32 %v1197, %v1037
    %v1230 = vmul.f32 %v1198, %v1038
    %v1231 = vmul.f32 %v1199, %v1039
    %v1232 = vmul.f32 %v1200, %v1040
    %v1233 = vmul.f32 %v1201, %v1041
    %v1234 = vmul.f32 %v1202, %v1042
    %v1235 = vmul.f32 %v1203, %v1043
    %v1236 = vmul.f32 %v1204, %v1044
    %v1237 = vmul.f32 %v1205, %v1045
    %v1238 = vmul.f32 %v1206, %v1046
    %v1239 = vmul.f32 %v1207, %v1047
    %v1240 = vmul.f32 %v1208, %v1048
    %v1241 = vmul.f32 %v1209, %v1049
    %v1242 = vmul.f32 %v1210, %v1050
    %v1243 = vmul.f32 %v1211, %v1051
    %v1244 = vmul.f32 %v1212, %v1052
    %v1245 = vmul.f32 %v1213, %v1053
    %v1246 = vmul.f32 %v1214, %v1054
    %v1247 = vmul.f32 %v1215, %v1055
    %v1248 = vmul.f32 %v1216, %v1056
    %v1249 = vmul.f32 %v1217, %v1057
    %v1250 = vmul.f32 %v1218, %v1058
    %v1251 = vmul.f32 %v1219, %v1059
    %v1252 = vmul.f32 %v1220, %v1060
    %v1253 = vmul.f32 %v1221, %v1061
    %v1254 = vsel %vm70, %v1222, 0.0
    %v1255 = vsel %vm70, %v1223, 0.0
    %v1256 = vadd.f32 %v1254, %v1255
    %v1257 = vrot.slane %v1256, 4
    %v1258 = vadd.f32 %v1256, %v1257
    %v1259 = vrot.slane %v1258, 2
    %v1260 = vadd.f32 %v1258, %v1259
    %v1261 = vrot.slane %v1260, 1
    %v1262 = vadd.f32 %v1260, %v1261
    %v1263 = vsel %vm70, %v1224, 0.0
    %v1264 = vsel %vm70, %v1225, 0.0
    %v1265 = vadd.f32 %v1263, %v1264
    %v1266 = vrot.slane %v1265, 4
    %v1267 = vadd.f32 %v1265, %v1266
    %v1268 = vrot.slane %v1267, 2
    %v1269 = vadd.f32 %v1267, %v1268
    %v1270 = vrot.slane %v1269, 1
    %v1271 = vadd.f32 %v1269, %v1270
    %v1272 = vsel %vm70, %v1226, 0.0
    %v1273 = vsel %vm70, %v1227, 0.0
    %v1274 = vadd.f32 %v1272, %v1273
    %v1275 = vrot.slane %v1274, 4
    %v1276 = vadd.f32 %v1274, %v1275
    %v1277 = vrot.slane %v1276, 2
    %v1278 = vadd.f32 %v1276, %v1277
    %v1279 = vrot.slane %v1278, 1
    %v1280 = vadd.f32 %v1278, %v1279
    %v1281 = vsel %vm70, %v1228, 0.0
    %v1282 = vsel %vm70, %v1229, 0.0
    %v1283 = vadd.f32 %v1281, %v1282
    %v1284 = vrot.slane %v1283, 4
    %v1285 = vadd.f32 %v1283, %v1284
    %v1286 = vrot.slane %v1285, 2
    %v1287 = vadd.f32 %v1285, %v1286
    %v1288 = vrot.slane %v1287, 1
    %v1289 = vadd.f32 %v1287, %v1288
    %v1290 = vsel %vm70, %v1230, 0.0
    %v1291 = vsel %vm70, %v1231, 0.0
    %v1292 = vadd.f32 %v1290, %v1291
    %v1293 = vrot.slane %v1292, 4
    %v1294 = vadd.f32 %v1292, %v1293
    %v1295 = vrot.slane %v1294, 2
    %v1296 = vadd.f32 %v1294, %v1295
    %v1297 = vrot.slane %v1296, 1
    %v1298 = vadd.f32 %v1296, %v1297
    %v1299 = vsel %vm70, %v1232, 0.0
    %v1300 = vsel %vm70, %v1233, 0.0
    %v1301 = vadd.f32 %v1299, %v1300
    %v1302 = vrot.slane %v1301, 4
    %v1303 = vadd.f32 %v1301, %v1302
    %v1304 = vrot.slane %v1303, 2
    %v1305 = vadd.f32 %v1303, %v1304
    %v1306 = vrot.slane %v1305, 1
    %v1307 = vadd.f32 %v1305, %v1306
    %v1308 = vsel %vm70, %v1234, 0.0
    %v1309 = vsel %vm70, %v1235, 0.0
    %v1310 = vadd.f32 %v1308, %v1309
    %v1311 = vrot.slane %v1310, 4
    %v1312 = vadd.f32 %v1310, %v1311
    %v1313 = vrot.slane %v1312, 2
    %v1314 = vadd.f32 %v1312, %v1313
    %v1315 = vrot.slane %v1314, 1
    %v1316 = vadd.f32 %v1314, %v1315
    %v1317 = vsel %vm70, %v1236, 0.0
    %v1318 = vsel %vm70, %v1237, 0.0
    %v1319 = vadd.f32 %v1317, %v1318
    %v1320 = vrot.slane %v1319, 4
    %v1321 = vadd.f32 %v1319, %v1320
    %v1322 = vrot.slane %v1321, 2
    %v1323 = vadd.f32 %v1321, %v1322
    %v1324 = vrot.slane %v1323, 1
    %v1325 = vadd.f32 %v1323, %v1324
    %v1326 = vsel %vm70, %v1238, 0.0
    %v1327 = vsel %vm70, %v1239, 0.0
    %v1328 = vadd.f32 %v1326, %v1327
    %v1329 = vrot.slane %v1328, 4
    %v1330 = vadd.f32 %v1328, %v1329
    %v1331 = vrot.slane %v1330, 2
    %v1332 = vadd.f32 %v1330, %v1331
    %v1333 = vrot.slane %v1332, 1
    %v1334 = vadd.f32 %v1332, %v1333
    %v1335 = vsel %vm70, %v1240, 0.0
    %v1336 = vsel %vm70, %v1241, 0.0
    %v1337 = vadd.f32 %v1335, %v1336
    %v1338 = vrot.slane %v1337, 4
    %v1339 = vadd.f32 %v1337, %v1338
    %v1340 = vrot.slane %v1339, 2
    %v1341 = vadd.f32 %v1339, %v1340
    %v1342 = vrot.slane %v1341, 1
    %v1343 = vadd.f32 %v1341, %v1342
    %v1344 = vsel %vm70, %v1242, 0.0
    %v1345 = vsel %vm70, %v1243, 0.0
    %v1346 = vadd.f32 %v1344, %v1345
    %v1347 = vrot.slane %v1346, 4
    %v1348 = vadd.f32 %v1346, %v1347
    %v1349 = vrot.slane %v1348, 2
    %v1350 = vadd.f32 %v1348, %v1349
    %v1351 = vrot.slane %v1350, 1
    %v1352 = vadd.f32 %v1350, %v1351
    %v1353 = vsel %vm70, %v1244, 0.0
    %v1354 = vsel %vm70, %v1245, 0.0
    %v1355 = vadd.f32 %v1353, %v1354
    %v1356 = vrot.slane %v1355, 4
    %v1357 = vadd.f32 %v1355, %v1356
    %v1358 = vrot.slane %v1357, 2
    %v1359 = vadd.f32 %v1357, %v1358
    %v1360 = vrot.slane %v1359, 1
    %v1361 = vadd.f32 %v1359, %v1360
    %v1362 = vsel %vm70, %v1246, 0.0
    %v1363 = vsel %vm70, %v1247, 0.0
    %v1364 = vadd.f32 %v1362, %v1363
    %v1365 = vrot.slane %v1364, 4
    %v1366 = vadd.f32 %v1364, %v1365
    %v1367 = vrot.slane %v1366, 2
    %v1368 = vadd.f32 %v1366, %v1367
    %v1369 = vrot.slane %v1368, 1
    %v1370 = vadd.f32 %v1368, %v1369
    %v1371 = vsel %vm70, %v1248, 0.0
    %v1372 = vsel %vm70, %v1249, 0.0
    %v1373 = vadd.f32 %v1371, %v1372
    %v1374 = vrot.slane %v1373, 4
    %v1375 = vadd.f32 %v1373, %v1374
    %v1376 = vrot.slane %v1375, 2
    %v1377 = vadd.f32 %v1375, %v1376
    %v1378 = vrot.slane %v1377, 1
    %v1379 = vadd.f32 %v1377, %v1378
    %v1380 = vsel %vm70, %v1250, 0.0
    %v1381 = vsel %vm70, %v1251, 0.0
    %v1382 = vadd.f32 %v1380, %v1381
    %v1383 = vrot.slane %v1382, 4
    %v1384 = vadd.f32 %v1382, %v1383
    %v1385 = vrot.slane %v1384, 2
    %v1386 = vadd.f32 %v1384, %v1385
    %v1387 = vrot.slane %v1386, 1
    %v1388 = vadd.f32 %v1386, %v1387
    %v1389 = vsel %vm70, %v1252, 0.0
    %v1390 = vsel %vm70, %v1253, 0.0
    %v1391 = vadd.f32 %v1389, %v1390
    %v1392 = vrot.slane %v1391, 4
    %v1393 = vadd.f32 %v1391, %v1392
    %v1394 = vrot.slane %v1393, 2
    %v1395 = vadd.f32 %v1393, %v1394
    %v1396 = vrot.slane %v1395, 1
    %v1397 = vadd.f32 %v1395, %v1396
    %v1398 = vmul.f32 %v948, %v1030
    %v1399 = vmul.f32 %v949, %v1031
    %v1400 = vmul.f32 %v948, %v1032
    %v1401 = vmul.f32 %v949, %v1033
    %v1402 = vmul.f32 %v948, %v1034
    %v1403 = vmul.f32 %v949, %v1035
    %v1404 = vmul.f32 %v948, %v1036
    %v1405 = vmul.f32 %v949, %v1037
    %v1406 = vmul.f32 %v948, %v1038
    %v1407 = vmul.f32 %v949, %v1039
    %v1408 = vmul.f32 %v948, %v1040
    %v1409 = vmul.f32 %v949, %v1041
    %v1410 = vmul.f32 %v948, %v1042
    %v1411 = vmul.f32 %v949, %v1043
    %v1412 = vmul.f32 %v948, %v1044
    %v1413 = vmul.f32 %v949, %v1045
    %v1414 = vmul.f32 %v948, %v1046
    %v1415 = vmul.f32 %v949, %v1047
    %v1416 = vmul.f32 %v948, %v1048
    %v1417 = vmul.f32 %v949, %v1049
    %v1418 = vmul.f32 %v948, %v1050
    %v1419 = vmul.f32 %v949, %v1051
    %v1420 = vmul.f32 %v948, %v1052
    %v1421 = vmul.f32 %v949, %v1053
    %v1422 = vmul.f32 %v948, %v1054
    %v1423 = vmul.f32 %v949, %v1055
    %v1424 = vmul.f32 %v948, %v1056
    %v1425 = vmul.f32 %v949, %v1057
    %v1426 = vmul.f32 %v948, %v1058
    %v1427 = vmul.f32 %v949, %v1059
    %v1428 = vmul.f32 %v948, %v1060
    %v1429 = vmul.f32 %v949, %v1061
    %v1430 = vsel %vm70, %v1398, 0.0
    %v1431 = vsel %vm70, %v1399, 0.0
    %v1432 = vadd.f32 %v1430, %v1431
    %v1433 = vrot.slane %v1432, 4
    %v1434 = vadd.f32 %v1432, %v1433
    %v1435 = vrot.slane %v1434, 2
    %v1436 = vadd.f32 %v1434, %v1435
    %v1437 = vrot.slane %v1436, 1
    %v1438 = vadd.f32 %v1436, %v1437
    %v1439 = vsel %vm70, %v1400, 0.0
    %v1440 = vsel %vm70, %v1401, 0.0
    %v1441 = vadd.f32 %v1439, %v1440
    %v1442 = vrot.slane %v1441, 4
    %v1443 = vadd.f32 %v1441, %v1442
    %v1444 = vrot.slane %v1443, 2
    %v1445 = vadd.f32 %v1443, %v1444
    %v1446 = vrot.slane %v1445, 1
    %v1447 = vadd.f32 %v1445, %v1446
    %v1448 = vsel %vm70, %v1402, 0.0
    %v1449 = vsel %vm70, %v1403, 0.0
    %v1450 = vadd.f32 %v1448, %v1449
    %v1451 = vrot.slane %v1450, 4
    %v1452 = vadd.f32 %v1450, %v1451
    %v1453 = vrot.slane %v1452, 2
    %v1454 = vadd.f32 %v1452, %v1453
    %v1455 = vrot.slane %v1454, 1
    %v1456 = vadd.f32 %v1454, %v1455
    %v1457 = vsel %vm70, %v1404, 0.0
    %v1458 = vsel %vm70, %v1405, 0.0
    %v1459 = vadd.f32 %v1457, %v1458
    %v1460 = vrot.slane %v1459, 4
    %v1461 = vadd.f32 %v1459, %v1460
    %v1462 = vrot.slane %v1461, 2
    %v1463 = vadd.f32 %v1461, %v1462
    %v1464 = vrot.slane %v1463, 1
    %v1465 = vadd.f32 %v1463, %v1464
    %v1466 = vsel %vm70, %v1406, 0.0
    %v1467 = vsel %vm70, %v1407, 0.0
    %v1468 = vadd.f32 %v1466, %v1467
    %v1469 = vrot.slane %v1468, 4
    %v1470 = vadd.f32 %v1468, %v1469
    %v1471 = vrot.slane %v1470, 2
    %v1472 = vadd.f32 %v1470, %v1471
    %v1473 = vrot.slane %v1472, 1
    %v1474 = vadd.f32 %v1472, %v1473
    %v1475 = vsel %vm70, %v1408, 0.0
    %v1476 = vsel %vm70, %v1409, 0.0
    %v1477 = vadd.f32 %v1475, %v1476
    %v1478 = vrot.slane %v1477, 4
    %v1479 = vadd.f32 %v1477, %v1478
    %v1480 = vrot.slane %v1479, 2
    %v1481 = vadd.f32 %v1479, %v1480
    %v1482 = vrot.slane %v1481, 1
    %v1483 = vadd.f32 %v1481, %v1482
    %v1484 = vsel %vm70, %v1410, 0.0
    %v1485 = vsel %vm70, %v1411, 0.0
    %v1486 = vadd.f32 %v1484, %v1485
    %v1487 = vrot.slane %v1486, 4
    %v1488 = vadd.f32 %v1486, %v1487
    %v1489 = vrot.slane %v1488, 2
    %v1490 = vadd.f32 %v1488, %v1489
    %v1491 = vrot.slane %v1490, 1
    %v1492 = vadd.f32 %v1490, %v1491
    %v1493 = vsel %vm70, %v1412, 0.0
    %v1494 = vsel %vm70, %v1413, 0.0
    %v1495 = vadd.f32 %v1493, %v1494
    %v1496 = vrot.slane %v1495, 4
    %v1497 = vadd.f32 %v1495, %v1496
    %v1498 = vrot.slane %v1497, 2
    %v1499 = vadd.f32 %v1497, %v1498
    %v1500 = vrot.slane %v1499, 1
    %v1501 = vadd.f32 %v1499, %v1500
    %v1502 = vsel %vm70, %v1414, 0.0
    %v1503 = vsel %vm70, %v1415, 0.0
    %v1504 = vadd.f32 %v1502, %v1503
    %v1505 = vrot.slane %v1504, 4
    %v1506 = vadd.f32 %v1504, %v1505
    %v1507 = vrot.slane %v1506, 2
    %v1508 = vadd.f32 %v1506, %v1507
    %v1509 = vrot.slane %v1508, 1
    %v1510 = vadd.f32 %v1508, %v1509
    %v1511 = vsel %vm70, %v1416, 0.0
    %v1512 = vsel %vm70, %v1417, 0.0
    %v1513 = vadd.f32 %v1511, %v1512
    %v1514 = vrot.slane %v1513, 4
    %v1515 = vadd.f32 %v1513, %v1514
    %v1516 = vrot.slane %v1515, 2
    %v1517 = vadd.f32 %v1515, %v1516
    %v1518 = vrot.slane %v1517, 1
    %v1519 = vadd.f32 %v1517, %v1518
    %v1520 = vsel %vm70, %v1418, 0.0
    %v1521 = vsel %vm70, %v1419, 0.0
    %v1522 = vadd.f32 %v1520, %v1521
    %v1523 = vrot.slane %v1522, 4
    %v1524 = vadd.f32 %v1522, %v1523
    %v1525 = vrot.slane %v1524, 2
    %v1526 = vadd.f32 %v1524, %v1525
    %v1527 = vrot.slane %v1526, 1
    %v1528 = vadd.f32 %v1526, %v1527
    %v1529 = vsel %vm70, %v1420, 0.0
    %v1530 = vsel %vm70, %v1421, 0.0
    %v1531 = vadd.f32 %v1529, %v1530
    %v1532 = vrot.slane %v1531, 4
    %v1533 = vadd.f32 %v1531, %v1532
    %v1534 = vrot.slane %v1533, 2
    %v1535 = vadd.f32 %v1533, %v1534
    %v1536 = vrot.slane %v1535, 1
    %v1537 = vadd.f32 %v1535, %v1536
    %v1538 = vsel %vm70, %v1422, 0.0
    %v1539 = vsel %vm70, %v1423, 0.0
    %v1540 = vadd.f32 %v1538, %v1539
    %v1541 = vrot.slane %v1540, 4
    %v1542 = vadd.f32 %v1540, %v1541
    %v1543 = vrot.slane %v1542, 2
    %v1544 = vadd.f32 %v1542, %v1543
    %v1545 = vrot.slane %v1544, 1
    %v1546 = vadd.f32 %v1544, %v1545
    %v1547 = vsel %vm70, %v1424, 0.0
    %v1548 = vsel %vm70, %v1425, 0.0
    %v1549 = vadd.f32 %v1547, %v1548
    %v1550 = vrot.slane %v1549, 4
    %v1551 = vadd.f32 %v1549, %v1550
    %v1552 = vrot.slane %v1551, 2
    %v1553 = vadd.f32 %v1551, %v1552
    %v1554 = vrot.slane %v1553, 1
    %v1555 = vadd.f32 %v1553, %v1554
    %v1556 = vsel %vm70, %v1426, 0.0
    %v1557 = vsel %vm70, %v1427, 0.0
    %v1558 = vadd.f32 %v1556, %v1557
    %v1559 = vrot.slane %v1558, 4
    %v1560 = vadd.f32 %v1558, %v1559
    %v1561 = vrot.slane %v1560, 2
    %v1562 = vadd.f32 %v1560, %v1561
    %v1563 = vrot.slane %v1562, 1
    %v1564 = vadd.f32 %v1562, %v1563
    %v1565 = vsel %vm70, %v1428, 0.0
    %v1566 = vsel %vm70, %v1429, 0.0
    %v1567 = vadd.f32 %v1565, %v1566
    %v1568 = vrot.slane %v1567, 4
    %v1569 = vadd.f32 %v1567, %v1568
    %v1570 = vrot.slane %v1569, 2
    %v1571 = vadd.f32 %v1569, %v1570
    %v1572 = vrot.slane %v1571, 1
    %v1573 = vadd.f32 %v1571, %v1572
    %v1574 = vmul.f32 %v280, %v304
    %v1575 = vmul.f32 %v281, %v304
    %vm1592 = vcmask 1041409
    %v1593 = vsel %vm1592, %v1271, %v1262
    %vm1594 = vcmask 1042434
    %v1595 = vsel %vm1594, %v1280, %v1593
    %vm1596 = vcmask 1043459
    %v1597 = vsel %vm1596, %v1289, %v1595
    %vm1598 = vcmask 1044484
    %v1599 = vsel %vm1598, %v1298, %v1597
    %vm1600 = vcmask 1045509
    %v1601 = vsel %vm1600, %v1307, %v1599
    %vm1602 = vcmask 1046534
    %v1603 = vsel %vm1602, %v1316, %v1601
    %vm1604 = vcmask 1047559
    %v1605 = vsel %vm1604, %v1325, %v1603
    %v1606 = vsel %vm1592, %v1343, %v1334
    %v1607 = vsel %vm1594, %v1352, %v1606
    %v1608 = vsel %vm1596, %v1361, %v1607
    %v1609 = vsel %vm1598, %v1370, %v1608
    %v1610 = vsel %vm1600, %v1379, %v1609
    %v1611 = vsel %vm1602, %v1388, %v1610
    %v1612 = vsel %vm1604, %v1397, %v1611
    %v1615 = vmul.f32 %v1574, %v1605
    %v1616 = vmul.f32 %v1575, %v1612
    %v1617 = vsel %vm70, %v1615, 0.0
    %1618 = vadd.xlane.f32.xlu0 %v1617
    %v1619 = vpop.xlane.xlu0 %1618
    %v1620 = vsel %vm70, %v1616, 0.0
    %1621 = vadd.xlane.f32.xlu0 %v1620
    %v1622 = vpop.xlane.xlu0 %1621
    %v1623 = vadd.f32 %v1619, %v1622
    %v1624 = vrot.slane %v1623, 4
    %v1625 = vadd.f32 %v1623, %v1624
    %v1626 = vrot.slane %v1625, 2
    %v1627 = vadd.f32 %v1625, %v1626
    %v1628 = vrot.slane %v1627, 1
    %v1629 = vadd.f32 %v1627, %v1628
    %v1630 = vmul.f32 %v280, %v307
    %v1631 = vmul.f32 %v281, %v307
    %v1648 = vsel %vm1592, %v1447, %v1438
    %v1649 = vsel %vm1594, %v1456, %v1648
    %v1650 = vsel %vm1596, %v1465, %v1649
    %v1651 = vsel %vm1598, %v1474, %v1650
    %v1652 = vsel %vm1600, %v1483, %v1651
    %v1653 = vsel %vm1602, %v1492, %v1652
    %v1654 = vsel %vm1604, %v1501, %v1653
    %v1655 = vsel %vm1592, %v1519, %v1510
    %v1656 = vsel %vm1594, %v1528, %v1655
    %v1657 = vsel %vm1596, %v1537, %v1656
    %v1658 = vsel %vm1598, %v1546, %v1657
    %v1659 = vsel %vm1600, %v1555, %v1658
    %v1660 = vsel %vm1602, %v1564, %v1659
    %v1661 = vsel %vm1604, %v1573, %v1660
    %v1664 = vmul.f32 %v1630, %v1654
    %v1665 = vmul.f32 %v1631, %v1661
    %v1666 = vsel %vm70, %v1664, 0.0
    %1667 = vadd.xlane.f32.xlu0 %v1666
    %v1668 = vpop.xlane.xlu0 %1667
    %v1669 = vsel %vm70, %v1665, 0.0
    %1670 = vadd.xlane.f32.xlu0 %v1669
    %v1671 = vpop.xlane.xlu0 %1670
    %v1672 = vadd.f32 %v1668, %v1671
    %v1673 = vrot.slane %v1672, 4
    %v1674 = vadd.f32 %v1672, %v1673
    %v1675 = vrot.slane %v1674, 2
    %v1676 = vadd.f32 %v1674, %v1675
    %v1677 = vrot.slane %v1676, 1
    %v1678 = vadd.f32 %v1676, %v1677
    %v1679 = vsub.f32 %v1629, %v1678
    %v1680 = vadd.f32 %v1679, 1.0
    %v1681 = vmax.f32 %v1680, 0.0
    %v1682 = vsel %vm70, %v294, 0.0
    %1683 = vadd.xlane.f32.xlu0 %v1682
    %v1684 = vpop.xlane.xlu0 %1683
    %vm1685 = vcmp.gt.f32.partialorder %v1684, 0.0
    %v1686 = vmul.f32 %v1681, 0.01
    %v1687 = vmul.f32 %v84, 0.99
    %v1688 = vadd.f32 %v1686, %v1687
    %v1689 = vsel %vm1685, %v1688, %v84
    %vm1690 = vcmask 0
    %1691 = vst.msk [vmem:[#allocation7] sm:$0x1] %vm1690, %v1689
    // Predicated region
    $region18: #{incremental_class_rectification_loss.1} parent=1 // pred_check
      _
    $region19: #{incremental_class_rectification_loss.1} parent=1 // pred_check_branch
      %1693 = sbr.rel (0) target = $region21
    $region20: #{incremental_class_rectification_loss.1} parent=1 // pred_region
      %1695 = vsyncadd [#allocation4], 0
      %s1697 = sshll.u32 [#allocation7], 4
      %s1698 = int_to_ptr.vmem [resolvable:$true] %s1697
      %s1699 = sshll.u32 %s2, 4
      %s1700 = int_to_ptr.hbm [resolvable:$true] %s1699
      %1702 = dma.vmem_to_hbm [thread:$0]  %s1698, 16, %s1700, [#allocation4]
    $region21: #{incremental_class_rectification_loss.1} parent=1 // pred_fallthru
      _
    // Predicated region
    $region22: #{incremental_class_rectification_loss.1} parent=1 // pred_check
      _
    $region23: #{incremental_class_rectification_loss.1} parent=1 // pred_check_branch
      %1704 = sbr.rel (0) target = $region25
    $region24: #{incremental_class_rectification_loss.1} parent=1 // pred_region
      %1706 = dma.done [#allocation4], 16
    $region25: #{incremental_class_rectification_loss.1} parent=1 // pred_fallthru
      _
    %1707 = vsyncpa [#allocation3], 1
    %1708 = vsyncpa [#allocation6], 1
    %1709 = vsyncpa [#allocation4], 1

</llo_original>
